<compile_context>
chip_gen: v5e
topology: v5e:2x2
jax: 0.10.0
libtpu: 0.0.40
codegen_flags: <defaults>
</compile_context>

<pallas_src>
from functools import partial

import jax
import jax.numpy as jnp
from jax import lax
from jax.experimental import pallas as pl
from jax.experimental.pallas import tpu as pltpu

VMEM_SPEC = pl.BlockSpec(memory_space=pltpu.MemorySpace.VMEM)


# ----------------------------------------------------------------------------
# Slab layouts (row offsets are 8-aligned; static Python ints baked into kernel)
# ----------------------------------------------------------------------------
def _make_layout(entries):
    layout, off, ncols = {}, 0, 0
    for name, (r, c) in entries:
        layout[name] = (off, r, c)
        off += ((r + 7) // 8) * 8
        ncols = max(ncols, c)
    return layout, off, ncols


def _weight_layout(K, Tf):
    return _make_layout([
        ("conv_w", (12, 2 * K)),         # block-diag [conv_past | conv_fut]
        ("conv_b", (1, 2 * K)),
        ("enc_wih", (2 * K, 6 * K)),     # merged past/fut encoder, gate order [rp rf|zp zf|np nf]
        ("enc_whh", (2 * K, 6 * K)),
        ("enc_bih", (1, 6 * K)),
        ("enc_bhh", (1, 6 * K)),
        ("gcn1_w", (K, K)),
        ("gcn1_b", (1, K)),
        ("gcn2_w", (K, K)),
        ("gcn2_b", (1, K)),
        ("dec_wih", (3 * K, 9 * K)),
        ("dec_whh", (3 * K, 9 * K)),
        ("dec_bih", (1, 9 * K)),
        ("dec_bhh", (1, 9 * K)),
        ("fc_w", (3 * K, 2)),
        ("fc_b", (1, 2)),
        ("ltri", (Tf, Tf)),              # lower-triangular prefix-sum matrix (constant)
    ])


def _act_layout(N, NPAD, T):
    return _make_layout([
        ("patch", (T * NPAD, 12)),       # im2col patches, past cols [0,6), future cols [6,12)
        ("adj", (N, N)),                 # normalized dense GCN adjacency
        ("present", (1, 2)),             # last observed position
    ])


def _pack_slab(layout, nrows, ncols, blocks):
    slab = jnp.zeros((nrows, ncols), jnp.float32)
    for name, arr in blocks.items():
        r0, r, c = layout[name]
        slab = slab.at[r0:r0 + r, 0:c].set(arr.astype(jnp.float32))
    return slab


# ----------------------------------------------------------------------------
# Single fused kernel
# ----------------------------------------------------------------------------
def _fused_forward_kernel(w_ref, act_ref, o_ref, *, N, NPAD, T, Tf, K, WL, AL):
    f32 = jnp.float32
    K2, K3 = 2 * K, 3 * K

    def W(name):
        r0, nr, nc = WL[name]
        return w_ref[r0:r0 + nr, 0:nc]

    def A(name):
        r0, nr, nc = AL[name]
        return act_ref[r0:r0 + nr, 0:nc]

    # ---- Conv1d(2, K, kernel=3, pad=1) for past AND future in one matmul ----
    # (block-diagonal combined weight: past patch cols feed lanes [0,K),
    #  future patch cols feed lanes [K,2K)), fused bias + ReLU.
    emb = jnp.maximum(
        jnp.dot(A("patch"), W("conv_w"), preferred_element_type=f32) + W("conv_b"),
        0.0)                                                   # (T*NPAD, 2K), time-major rows

    # ---- merged past+future GRU encoder --------------------------------------
    # Input-side projection hoisted out of the recurrence (one batched matmul);
    # only h @ W_hh stays on the serial critical path.
    gx_all = (jnp.dot(emb, W("enc_wih"), preferred_element_type=f32)
              + W("enc_bih"))                                  # (T*NPAD, 6K)
    whh = W("enc_whh")
    bhh = W("enc_bhh")
    h = jnp.zeros((NPAD, K2), f32)                             # lanes [0,K)=past, [K,2K)=future
    for t in range(T):                                         # static, unrolled
        gx = gx_all[t * NPAD:(t + 1) * NPAD, :]
        gh = jnp.dot(h, whh, preferred_element_type=f32) + bhh
        r = jax.nn.sigmoid(gx[:, :K2] + gh[:, :K2])
        z = jax.nn.sigmoid(gx[:, K2:2 * K2] + gh[:, K2:2 * K2])
        n = jnp.tanh(gx[:, 2 * K2:] + r * gh[:, 2 * K2:])
        h = (1.0 - z) * n + z * h
    state_nodes = h[:N, :K]                                    # (N, K)  surrounding nodes
    target_past = h[N:N + 1, :K]                               # (1, K)  ego past encoding
    state_fut = h[0:1, K:K2]                                   # (1, K)  ego future encoding

    # ---- two GCNConv layers: relu(A (X W1^T) + b1) -> A (. W2^T) + b2 --------
    adj = A("adj")
    h1 = jnp.dot(state_nodes, W("gcn1_w"), preferred_element_type=f32)
    h1 = jnp.maximum(jnp.dot(adj, h1, preferred_element_type=f32) + W("gcn1_b"), 0.0)
    # TODO(synk): F.dropout(training=True) between GCN layers modeled as eval-mode identity.
    h2 = jnp.dot(h1, W("gcn2_w"), preferred_element_type=f32)
    x1 = jnp.dot(adj, h2, preferred_element_type=f32) + W("gcn2_b")
    interact = x1[0:1, :]                                      # ego node embedding (1, K)

    # ---- autoregressive decoder GRU(3K, 3K) -----------------------------------
    d_wih = W("dec_wih")
    d_whh = W("dec_whh")
    d_bih = W("dec_bih")
    d_bhh = W("dec_bhh")
    state_conc = jnp.concatenate([interact, target_past, state_fut], axis=1)   # (1, 3K)
    gx0 = jnp.dot(state_conc, d_wih, preferred_element_type=f32) + d_bih       # (1, 9K)
    hd = jnp.zeros((1, K3), f32)                               # zero_padding initial state
    hs = []
    for i in range(Tf):                                        # static, unrolled
        gx = gx0 if i == 0 else d_bih                          # input is zeros after step 0
        gh = jnp.dot(hd, d_whh, preferred_element_type=f32) + d_bhh
        r = jax.nn.sigmoid(gx[:, :K3] + gh[:, :K3])
        z = jax.nn.sigmoid(gx[:, K3:2 * K3] + gh[:, K3:2 * K3])
        n = jnp.tanh(gx[:, 2 * K3:] + r * gh[:, 2 * K3:])
        hd = (1.0 - z) * n + z * hd
        hs.append(hd)
    hs_all = jnp.concatenate(hs, axis=0)                       # (Tf, 3K)

    # ---- FC_output once for all steps + cumulative positions ------------------
    disp = (jnp.dot(hs_all, W("fc_w"), preferred_element_type=f32)
            + W("fc_b"))                                       # (Tf, 2) per-step displacement
    cum = jnp.dot(W("ltri"), disp, preferred_element_type=f32)  # inclusive prefix sum
    o_ref[...] = A("present") + cum                            # (Tf, 2) absolute positions


# ----------------------------------------------------------------------------
# XLA glue (tiny): im2col patches, dense normalized adjacency
# ----------------------------------------------------------------------------
def _im2col(traj):
    """traj: (R, T, 2) -> (R, T, 6) patches; feature index = c*3 + dt (torch flatten order)."""
    R, T, _ = traj.shape
    xp = jnp.pad(traj, ((0, 0), (1, 1), (0, 0)))   # zero padding=1 along time
    return jnp.stack([xp[:, dt:dt + T, c] for c in range(2) for dt in range(3)], axis=-1)


def gcn_normalize_dense(edge_index, edge_weight, num_nodes):
    """Dense \\hat{A} = D^-1/2 (A + I) D^-1/2 exactly as torch_geometric gcn_norm."""
    row = edge_index[0]
    col = edge_index[1]
    loop = jnp.arange(num_nodes, dtype=edge_index.dtype)
    row_f = jnp.concatenate([row, loop])
    col_f = jnp.concatenate([col, loop])
    w_f = jnp.concatenate([edge_weight, jnp.ones((num_nodes,), edge_weight.dtype)])
    deg = jnp.zeros((num_nodes,), edge_weight.dtype).at[col_f].add(w_f)
    dis = jnp.where(deg > 0.0, jax.lax.rsqrt(jnp.maximum(deg, 1e-20)), 0.0)
    norm = dis[row_f] * w_f * dis[col_f]
    # aggregation: out[target] += norm * h[source]  ->  A[target, source] = norm
    A = jnp.zeros((num_nodes, num_nodes), jnp.float32).at[col_f, row_f].add(norm)
    return A


# ----------------------------------------------------------------------------
# Weight-slab packing (done ONCE, off the per-call path)
# ----------------------------------------------------------------------------
def _combine_gru(ep, ef, K):
    """Block-diagonal merged encoder weights, gate columns [r_p r_f | z_p z_f | n_p n_f]."""
    def cw(wp, wf):
        w = jnp.zeros((2 * K, 6 * K), jnp.float32)
        for g in range(3):
            w = w.at[0:K, 2 * g * K:(2 * g + 1) * K].set(wp[:, g * K:(g + 1) * K])
            w = w.at[K:2 * K, (2 * g + 1) * K:(2 * g + 2) * K].set(wf[:, g * K:(g + 1) * K])
        return w

    def cb(bp, bf):
        b = jnp.zeros((1, 6 * K), jnp.float32)
        for g in range(3):
            b = b.at[:, 2 * g * K:(2 * g + 1) * K].set(bp[:, g * K:(g + 1) * K])
            b = b.at[:, (2 * g + 1) * K:(2 * g + 2) * K].set(bf[:, g * K:(g + 1) * K])
        return b

    return (cw(ep["wih_t"], ef["wih_t"]), cw(ep["whh_t"], ef["whh_t"]),
            cb(ep["bih"], ef["bih"]), cb(ep["bhh"], ef["bhh"]))


def prepare_weights(params, *, K, future_len):
    """Pack all model weights (plus the constant prefix-sum matrix) into one f32 slab."""
    ep, ef, dec = params["enc_past"], params["enc_fut"], params["dec"]
    conv_w = (jnp.zeros((12, 2 * K), jnp.float32)
              .at[0:6, 0:K].set(params["conv_past_w"])
              .at[6:12, K:2 * K].set(params["conv_fut_w"]))
    conv_b = jnp.concatenate([params["conv_past_b"], params["conv_fut_b"]], axis=1)
    enc_wih, enc_whh, enc_bih, enc_bhh = _combine_gru(ep, ef, K)
    ltri = jnp.tril(jnp.ones((future_len, future_len), jnp.float32))

    blocks = {
        "conv_w": conv_w, "conv_b": conv_b,
        "enc_wih": enc_wih, "enc_whh": enc_whh, "enc_bih": enc_bih, "enc_bhh": enc_bhh,
        "gcn1_w": params["gcn1_wt"], "gcn1_b": params["gcn1_b"],
        "gcn2_w": params["gcn2_wt"], "gcn2_b": params["gcn2_b"],
        "dec_wih": dec["wih_t"], "dec_whh": dec["whh_t"],
        "dec_bih": dec["bih"], "dec_bhh": dec["bhh"],
        "fc_w": params["fc_wt"], "fc_b": params["fc_b"],
        "ltri": ltri,
    }
    WL, WR, WC = _weight_layout(K, future_len)
    return _pack_slab(WL, WR, WC, blocks)


# ----------------------------------------------------------------------------
# Full forward pass (single pallas_call, 2 input DMAs)
# ----------------------------------------------------------------------------
def model_forward(wslab, past, future, x, edge_index, edge_weight,
                  *, past_len, future_len, K):
    dim_batch = past.shape[0]
    assert dim_batch == 1, "torch module semantics only hold for batch size 1"
    N, T, _ = x.shape
    Tf = future.shape[1]
    assert T == past_len and Tf == future_len
    # TODO(synk): merged encoder requires past_len == future_len; general case would
    # fall back to two separate recurrences.
    assert T == Tf, "merged encoder path requires past_len == future_len"
    NP1 = N + 1
    NPAD = ((NP1 + 7) // 8) * 8          # pad past-encoder batch to a sublane multiple

    present = past[:, -1, :2]            # (1, 2)

    # One shared batch: N surrounding nodes + the ego past, zero-padded to NPAD rows.
    # Future patches ride in columns [6,12) of row 0 (future hidden lives in lanes
    # [K,2K) of the merged state, so there is no interference with the past path).
    traj_all = jnp.concatenate(
        [x, past, jnp.zeros((NPAD - NP1, T, 2), jnp.float32)], axis=0)   # (NPAD, T, 2)
    patch_p = _im2col(traj_all)                                          # (NPAD, T, 6)
    patch_f = _im2col(future)                                            # (1, Tf, 6)
    fut_full = jnp.zeros((NPAD, T, 6), jnp.float32).at[0].set(patch_f[0])
    patch = jnp.transpose(jnp.concatenate([patch_p, fut_full], axis=-1),
                          (1, 0, 2)).reshape(T * NPAD, 12)               # time-major rows

    # GCN normalized dense adjacency (edge_weight assumed non-empty).
    # TODO(synk): torch branch for edge_weight.numel()==0 (interact := zeros) not modeled.
    ei = edge_index.reshape(2, -1)
    ew = edge_weight.reshape(-1)
    A = gcn_normalize_dense(ei, ew, N)

    AL, AR, AC = _act_layout(N, NPAD, T)
    act = _pack_slab(AL, AR, AC, {"patch": patch, "adj": A, "present": present})

    WL, _, _ = _weight_layout(K, future_len)
    kernel = partial(_fused_forward_kernel, N=N, NPAD=NPAD, T=T, Tf=Tf, K=K, WL=WL, AL=AL)
    pred = pl.pallas_call(
        kernel,
        out_shape=jax.ShapeDtypeStruct((future_len, 2), jnp.float32),
        in_specs=[VMEM_SPEC, VMEM_SPEC],
        out_specs=VMEM_SPEC,
    )(wslab, act)
    return pred[None]                    # (1, future_len, 2)


model_forward_jit = jax.jit(model_forward, static_argnames=("past_len", "future_len", "K"))


# ----------------------------------------------------------------------------
# Deterministic synthetic parameters (shapes follow the torch module __init__)
# ----------------------------------------------------------------------------
def init_params(key, K):
    ks = iter(jax.random.split(key, 24))

    def rnd(shape, scale=0.2):
        return scale * jax.random.normal(next(ks), shape, jnp.float32)

    return {
        # Conv1d(2, K, kernel=3, pad=1):  stored as (6, K) = (K,2,3).reshape(K,6).T
        "conv_past_w": rnd((6, K)), "conv_past_b": rnd((1, K)),
        "conv_fut_w": rnd((6, K)), "conv_fut_b": rnd((1, K)),
        # GRU(K, K): weights stored pre-transposed, gate order [r | z | n]
        "enc_past": {"wih_t": rnd((K, 3 * K)), "whh_t": rnd((K, 3 * K)),
                     "bih": rnd((1, 3 * K)), "bhh": rnd((1, 3 * K))},
        "enc_fut": {"wih_t": rnd((K, 3 * K)), "whh_t": rnd((K, 3 * K)),
                    "bih": rnd((1, 3 * K)), "bhh": rnd((1, 3 * K))},
        # GCNConv(K, K) x 2: lin weight stored transposed (K_in, K_out), plus bias
        "gcn1_wt": rnd((K, K)), "gcn1_b": rnd((1, K)),
        "gcn2_wt": rnd((K, K)), "gcn2_b": rnd((1, K)),
        # decoder GRU(3K, 3K)
        "dec": {"wih_t": rnd((3 * K, 9 * K)), "whh_t": rnd((3 * K, 9 * K)),
                "bih": rnd((1, 9 * K)), "bhh": rnd((1, 9 * K))},
        # FC_output: Linear(3K, 2), stored transposed
        "fc_wt": rnd((3 * K, 2)), "fc_b": rnd((1, 2)),
    }


if __name__ == "__main__":
    K = 16            # dim_embedding_key
    past_len = 8
    future_len = 8
    B = 1             # batch (module semantics require 1)
    N = 4             # total node number (ego = node 0)
    E = 6             # number of edges

    key = jax.random.PRNGKey(0)
    k1, k2, k3, k4, kp = jax.random.split(key, 5)

    past = jax.random.normal(k1, (B, past_len, 2), jnp.float32)
    future = jax.random.normal(k2, (B, future_len, 2), jnp.float32)
    x = jax.random.normal(k3, (N, past_len, 2), jnp.float32)
    x = x.at[0].set(past[0])  # node 0 is the ego vehicle

    edge_index = jnp.array([[[0, 0, 0, 1, 2, 3],
                             [1, 2, 3, 0, 0, 0]]], dtype=jnp.int32)   # (B, 2, E)
    edge_weight = jnp.abs(jax.random.normal(k4, (B, E), jnp.float32)) + 0.1

    params = init_params(kp, K)
    wslab = prepare_weights(params, K=K, future_len=future_len)   # packed once, off hot path

    pred = model_forward_jit(wslab, past, future, x, edge_index, edge_weight,
                             past_len=past_len, future_len=future_len, K=K)
    pred = jax.block_until_ready(pred)
    assert pred.shape == (B, future_len, 2)
    assert bool(jnp.all(jnp.isfinite(pred)))
    print("KERNEL_OK")
</pallas_src>

<mosaic_0001>
module attributes {stable_mosaic.version = 11 : i64} {
  func.func @_fused_forward_kernel(%arg0: memref<328x144xf32, #tpu.memory_space<vmem>>, %arg1: memref<80x12xf32, #tpu.memory_space<vmem>>, %arg2: memref<8x2xf32, #tpu.memory_space<vmem>>) attributes {dimension_semantics = [], scalar_prefetch = 0 : i64, scratch_operands = 0 : i64, tpu.core_type = #tpu.core_type<tc>} {
    %c0 = arith.constant 0 : index
    %c0_0 = arith.constant 0 : index
    %0 = vector.load %arg1[%c0, %c0_0] : memref<80x12xf32, #tpu.memory_space<vmem>>, vector<64x12xf32>
    %c0_1 = arith.constant 0 : index
    %c0_2 = arith.constant 0 : index
    %1 = vector.load %arg0[%c0_1, %c0_2] : memref<328x144xf32, #tpu.memory_space<vmem>>, vector<12x32xf32>
    %cst = arith.constant dense<0.000000e+00> : vector<64x32xf32>
    %2 = tpu.matmul %0, %1, %cst {dimension_numbers = #tpu.dot_dimension_numbers<[1], [0], [0], [1], [0, 0, 1, 1], [], []>} : vector<64x12xf32>, vector<12x32xf32>, vector<64x32xf32> -> vector<64x32xf32>
    %c16 = arith.constant 16 : index
    %c0_3 = arith.constant 0 : index
    %3 = vector.load %arg0[%c16, %c0_3] : memref<328x144xf32, #tpu.memory_space<vmem>>, vector<1x32xf32>
    %4 = vector.broadcast %3 : vector<1x32xf32> to vector<64x32xf32>
    %5 = arith.addf %2, %4 : vector<64x32xf32>
    %cst_4 = arith.constant 0.000000e+00 : f32
    %6 = vector.broadcast %cst_4 : f32 to vector<64x32xf32>
    %7 = arith.maximumf %5, %6 : vector<64x32xf32>
    %c24 = arith.constant 24 : index
    %c0_5 = arith.constant 0 : index
    %8 = vector.load %arg0[%c24, %c0_5] : memref<328x144xf32, #tpu.memory_space<vmem>>, vector<32x96xf32>
    %cst_6 = arith.constant dense<0.000000e+00> : vector<64x96xf32>
    %9 = tpu.matmul %7, %8, %cst_6 {dimension_numbers = #tpu.dot_dimension_numbers<[1], [0], [0], [1], [0, 0, 1, 1], [], []>} : vector<64x32xf32>, vector<32x96xf32>, vector<64x96xf32> -> vector<64x96xf32>
    %c88 = arith.constant 88 : index
    %c0_7 = arith.constant 0 : index
    %10 = vector.load %arg0[%c88, %c0_7] : memref<328x144xf32, #tpu.memory_space<vmem>>, vector<1x96xf32>
    %11 = vector.broadcast %10 : vector<1x96xf32> to vector<64x96xf32>
    %12 = arith.addf %9, %11 : vector<64x96xf32>
    %c56 = arith.constant 56 : index
    %c0_8 = arith.constant 0 : index
    %13 = vector.load %arg0[%c56, %c0_8] : memref<328x144xf32, #tpu.memory_space<vmem>>, vector<32x96xf32>
    %c96 = arith.constant 96 : index
    %c0_9 = arith.constant 0 : index
    %14 = vector.load %arg0[%c96, %c0_9] : memref<328x144xf32, #tpu.memory_space<vmem>>, vector<1x96xf32>
    %cst_10 = arith.constant 0.000000e+00 : f32
    %15 = vector.broadcast %cst_10 : f32 to vector<8x32xf32>
    %16 = vector.extract_strided_slice %12 {offsets = [0, 0], sizes = [8, 96], strides = [1, 1]} : vector<64x96xf32> to vector<8x96xf32>
    %cst_11 = arith.constant dense<0.000000e+00> : vector<8x96xf32>
    %17 = tpu.matmul %15, %13, %cst_11 {dimension_numbers = #tpu.dot_dimension_numbers<[1], [0], [0], [1], [0, 0, 1, 1], [], []>} : vector<8x32xf32>, vector<32x96xf32>, vector<8x96xf32> -> vector<8x96xf32>
    %18 = vector.broadcast %14 : vector<1x96xf32> to vector<8x96xf32>
    %19 = arith.addf %17, %18 : vector<8x96xf32>
    %20 = vector.extract_strided_slice %16 {offsets = [0, 0], sizes = [8, 32], strides = [1, 1]} : vector<8x96xf32> to vector<8x32xf32>
    %21 = vector.extract_strided_slice %19 {offsets = [0, 0], sizes = [8, 32], strides = [1, 1]} : vector<8x96xf32> to vector<8x32xf32>
    %22 = arith.addf %20, %21 : vector<8x32xf32>
    %23 = arith.negf %22 : vector<8x32xf32>
    %24 = math.exp %23 : vector<8x32xf32>
    %cst_12 = arith.constant 1.000000e+00 : f32
    %25 = vector.broadcast %cst_12 : f32 to vector<8x32xf32>
    %26 = arith.addf %25, %24 : vector<8x32xf32>
    %27 = arith.divf %25, %26 : vector<8x32xf32>
    %28 = vector.extract_strided_slice %16 {offsets = [0, 32], sizes = [8, 32], strides = [1, 1]} : vector<8x96xf32> to vector<8x32xf32>
    %29 = vector.extract_strided_slice %19 {offsets = [0, 32], sizes = [8, 32], strides = [1, 1]} : vector<8x96xf32> to vector<8x32xf32>
    %30 = arith.addf %28, %29 : vector<8x32xf32>
    %31 = arith.negf %30 : vector<8x32xf32>
    %32 = math.exp %31 : vector<8x32xf32>
    %cst_13 = arith.constant 1.000000e+00 : f32
    %33 = vector.broadcast %cst_13 : f32 to vector<8x32xf32>
    %34 = arith.addf %33, %32 : vector<8x32xf32>
    %35 = arith.divf %33, %34 : vector<8x32xf32>
    %36 = vector.extract_strided_slice %16 {offsets = [0, 64], sizes = [8, 32], strides = [1, 1]} : vector<8x96xf32> to vector<8x32xf32>
    %37 = vector.extract_strided_slice %19 {offsets = [0, 64], sizes = [8, 32], strides = [1, 1]} : vector<8x96xf32> to vector<8x32xf32>
    %38 = arith.mulf %27, %37 : vector<8x32xf32>
    %39 = arith.addf %36, %38 : vector<8x32xf32>
    %40 = math.tanh %39 : vector<8x32xf32>
    %cst_14 = arith.constant 1.000000e+00 : f32
    %41 = vector.broadcast %cst_14 : f32 to vector<8x32xf32>
    %42 = arith.subf %41, %35 : vector<8x32xf32>
    %43 = arith.mulf %42, %40 : vector<8x32xf32>
    %44 = arith.mulf %35, %15 : vector<8x32xf32>
    %45 = arith.addf %43, %44 : vector<8x32xf32>
    %46 = vector.extract_strided_slice %12 {offsets = [8, 0], sizes = [8, 96], strides = [1, 1]} : vector<64x96xf32> to vector<8x96xf32>
    %cst_15 = arith.constant dense<0.000000e+00> : vector<8x96xf32>
    %47 = tpu.matmul %45, %13, %cst_15 {dimension_numbers = #tpu.dot_dimension_numbers<[1], [0], [0], [1], [0, 0, 1, 1], [], []>} : vector<8x32xf32>, vector<32x96xf32>, vector<8x96xf32> -> vector<8x96xf32>
    %48 = vector.broadcast %14 : vector<1x96xf32> to vector<8x96xf32>
    %49 = arith.addf %47, %48 : vector<8x96xf32>
    %50 = vector.extract_strided_slice %46 {offsets = [0, 0], sizes = [8, 32], strides = [1, 1]} : vector<8x96xf32> to vector<8x32xf32>
    %51 = vector.extract_strided_slice %49 {offsets = [0, 0], sizes = [8, 32], strides = [1, 1]} : vector<8x96xf32> to vector<8x32xf32>
    %52 = arith.addf %50, %51 : vector<8x32xf32>
    %53 = arith.negf %52 : vector<8x32xf32>
    %54 = math.exp %53 : vector<8x32xf32>
    %cst_16 = arith.constant 1.000000e+00 : f32
    %55 = vector.broadcast %cst_16 : f32 to vector<8x32xf32>
    %56 = arith.addf %55, %54 : vector<8x32xf32>
    %57 = arith.divf %55, %56 : vector<8x32xf32>
    %58 = vector.extract_strided_slice %46 {offsets = [0, 32], sizes = [8, 32], strides = [1, 1]} : vector<8x96xf32> to vector<8x32xf32>
    %59 = vector.extract_strided_slice %49 {offsets = [0, 32], sizes = [8, 32], strides = [1, 1]} : vector<8x96xf32> to vector<8x32xf32>
    %60 = arith.addf %58, %59 : vector<8x32xf32>
    %61 = arith.negf %60 : vector<8x32xf32>
    %62 = math.exp %61 : vector<8x32xf32>
    %cst_17 = arith.constant 1.000000e+00 : f32
    %63 = vector.broadcast %cst_17 : f32 to vector<8x32xf32>
    %64 = arith.addf %63, %62 : vector<8x32xf32>
    %65 = arith.divf %63, %64 : vector<8x32xf32>
    %66 = vector.extract_strided_slice %46 {offsets = [0, 64], sizes = [8, 32], strides = [1, 1]} : vector<8x96xf32> to vector<8x32xf32>
    %67 = vector.extract_strided_slice %49 {offsets = [0, 64], sizes = [8, 32], strides = [1, 1]} : vector<8x96xf32> to vector<8x32xf32>
    %68 = arith.mulf %57, %67 : vector<8x32xf32>
    %69 = arith.addf %66, %68 : vector<8x32xf32>
    %70 = math.tanh %69 : vector<8x32xf32>
    %cst_18 = arith.constant 1.000000e+00 : f32
    %71 = vector.broadcast %cst_18 : f32 to vector<8x32xf32>
    %72 = arith.subf %71, %65 : vector<8x32xf32>
    %73 = arith.mulf %72, %70 : vector<8x32xf32>
    %74 = arith.mulf %65, %45 : vector<8x32xf32>
    %75 = arith.addf %73, %74 : vector<8x32xf32>
    %76 = vector.extract_strided_slice %12 {offsets = [16, 0], sizes = [8, 96], strides = [1, 1]} : vector<64x96xf32> to vector<8x96xf32>
    %cst_19 = arith.constant dense<0.000000e+00> : vector<8x96xf32>
    %77 = tpu.matmul %75, %13, %cst_19 {dimension_numbers = #tpu.dot_dimension_numbers<[1], [0], [0], [1], [0, 0, 1, 1], [], []>} : vector<8x32xf32>, vector<32x96xf32>, vector<8x96xf32> -> vector<8x96xf32>
    %78 = vector.broadcast %14 : vector<1x96xf32> to vector<8x96xf32>
    %79 = arith.addf %77, %78 : vector<8x96xf32>
    %80 = vector.extract_strided_slice %76 {offsets = [0, 0], sizes = [8, 32], strides = [1, 1]} : vector<8x96xf32> to vector<8x32xf32>
    %81 = vector.extract_strided_slice %79 {offsets = [0, 0], sizes = [8, 32], strides = [1, 1]} : vector<8x96xf32> to vector<8x32xf32>
    %82 = arith.addf %80, %81 : vector<8x32xf32>
    %83 = arith.negf %82 : vector<8x32xf32>
    %84 = math.exp %83 : vector<8x32xf32>
    %cst_20 = arith.constant 1.000000e+00 : f32
    %85 = vector.broadcast %cst_20 : f32 to vector<8x32xf32>
    %86 = arith.addf %85, %84 : vector<8x32xf32>
    %87 = arith.divf %85, %86 : vector<8x32xf32>
    %88 = vector.extract_strided_slice %76 {offsets = [0, 32], sizes = [8, 32], strides = [1, 1]} : vector<8x96xf32> to vector<8x32xf32>
    %89 = vector.extract_strided_slice %79 {offsets = [0, 32], sizes = [8, 32], strides = [1, 1]} : vector<8x96xf32> to vector<8x32xf32>
    %90 = arith.addf %88, %89 : vector<8x32xf32>
    %91 = arith.negf %90 : vector<8x32xf32>
    %92 = math.exp %91 : vector<8x32xf32>
    %cst_21 = arith.constant 1.000000e+00 : f32
    %93 = vector.broadcast %cst_21 : f32 to vector<8x32xf32>
    %94 = arith.addf %93, %92 : vector<8x32xf32>
    %95 = arith.divf %93, %94 : vector<8x32xf32>
    %96 = vector.extract_strided_slice %76 {offsets = [0, 64], sizes = [8, 32], strides = [1, 1]} : vector<8x96xf32> to vector<8x32xf32>
    %97 = vector.extract_strided_slice %79 {offsets = [0, 64], sizes = [8, 32], strides = [1, 1]} : vector<8x96xf32> to vector<8x32xf32>
    %98 = arith.mulf %87, %97 : vector<8x32xf32>
    %99 = arith.addf %96, %98 : vector<8x32xf32>
    %100 = math.tanh %99 : vector<8x32xf32>
    %cst_22 = arith.constant 1.000000e+00 : f32
    %101 = vector.broadcast %cst_22 : f32 to vector<8x32xf32>
    %102 = arith.subf %101, %95 : vector<8x32xf32>
    %103 = arith.mulf %102, %100 : vector<8x32xf32>
    %104 = arith.mulf %95, %75 : vector<8x32xf32>
    %105 = arith.addf %103, %104 : vector<8x32xf32>
    %106 = vector.extract_strided_slice %12 {offsets = [24, 0], sizes = [8, 96], strides = [1, 1]} : vector<64x96xf32> to vector<8x96xf32>
    %cst_23 = arith.constant dense<0.000000e+00> : vector<8x96xf32>
    %107 = tpu.matmul %105, %13, %cst_23 {dimension_numbers = #tpu.dot_dimension_numbers<[1], [0], [0], [1], [0, 0, 1, 1], [], []>} : vector<8x32xf32>, vector<32x96xf32>, vector<8x96xf32> -> vector<8x96xf32>
    %108 = vector.broadcast %14 : vector<1x96xf32> to vector<8x96xf32>
    %109 = arith.addf %107, %108 : vector<8x96xf32>
    %110 = vector.extract_strided_slice %106 {offsets = [0, 0], sizes = [8, 32], strides = [1, 1]} : vector<8x96xf32> to vector<8x32xf32>
    %111 = vector.extract_strided_slice %109 {offsets = [0, 0], sizes = [8, 32], strides = [1, 1]} : vector<8x96xf32> to vector<8x32xf32>
    %112 = arith.addf %110, %111 : vector<8x32xf32>
    %113 = arith.negf %112 : vector<8x32xf32>
    %114 = math.exp %113 : vector<8x32xf32>
    %cst_24 = arith.constant 1.000000e+00 : f32
    %115 = vector.broadcast %cst_24 : f32 to vector<8x32xf32>
    %116 = arith.addf %115, %114 : vector<8x32xf32>
    %117 = arith.divf %115, %116 : vector<8x32xf32>
    %118 = vector.extract_strided_slice %106 {offsets = [0, 32], sizes = [8, 32], strides = [1, 1]} : vector<8x96xf32> to vector<8x32xf32>
    %119 = vector.extract_strided_slice %109 {offsets = [0, 32], sizes = [8, 32], strides = [1, 1]} : vector<8x96xf32> to vector<8x32xf32>
    %120 = arith.addf %118, %119 : vector<8x32xf32>
    %121 = arith.negf %120 : vector<8x32xf32>
    %122 = math.exp %121 : vector<8x32xf32>
    %cst_25 = arith.constant 1.000000e+00 : f32
    %123 = vector.broadcast %cst_25 : f32 to vector<8x32xf32>
    %124 = arith.addf %123, %122 : vector<8x32xf32>
    %125 = arith.divf %123, %124 : vector<8x32xf32>
    %126 = vector.extract_strided_slice %106 {offsets = [0, 64], sizes = [8, 32], strides = [1, 1]} : vector<8x96xf32> to vector<8x32xf32>
    %127 = vector.extract_strided_slice %109 {offsets = [0, 64], sizes = [8, 32], strides = [1, 1]} : vector<8x96xf32> to vector<8x32xf32>
    %128 = arith.mulf %117, %127 : vector<8x32xf32>
    %129 = arith.addf %126, %128 : vector<8x32xf32>
    %130 = math.tanh %129 : vector<8x32xf32>
    %cst_26 = arith.constant 1.000000e+00 : f32
    %131 = vector.broadcast %cst_26 : f32 to vector<8x32xf32>
    %132 = arith.subf %131, %125 : vector<8x32xf32>
    %133 = arith.mulf %132, %130 : vector<8x32xf32>
    %134 = arith.mulf %125, %105 : vector<8x32xf32>
    %135 = arith.addf %133, %134 : vector<8x32xf32>
    %136 = vector.extract_strided_slice %12 {offsets = [32, 0], sizes = [8, 96], strides = [1, 1]} : vector<64x96xf32> to vector<8x96xf32>
    %cst_27 = arith.constant dense<0.000000e+00> : vector<8x96xf32>
    %137 = tpu.matmul %135, %13, %cst_27 {dimension_numbers = #tpu.dot_dimension_numbers<[1], [0], [0], [1], [0, 0, 1, 1], [], []>} : vector<8x32xf32>, vector<32x96xf32>, vector<8x96xf32> -> vector<8x96xf32>
    %138 = vector.broadcast %14 : vector<1x96xf32> to vector<8x96xf32>
    %139 = arith.addf %137, %138 : vector<8x96xf32>
    %140 = vector.extract_strided_slice %136 {offsets = [0, 0], sizes = [8, 32], strides = [1, 1]} : vector<8x96xf32> to vector<8x32xf32>
    %141 = vector.extract_strided_slice %139 {offsets = [0, 0], sizes = [8, 32], strides = [1, 1]} : vector<8x96xf32> to vector<8x32xf32>
    %142 = arith.addf %140, %141 : vector<8x32xf32>
    %143 = arith.negf %142 : vector<8x32xf32>
    %144 = math.exp %143 : vector<8x32xf32>
    %cst_28 = arith.constant 1.000000e+00 : f32
    %145 = vector.broadcast %cst_28 : f32 to vector<8x32xf32>
    %146 = arith.addf %145, %144 : vector<8x32xf32>
    %147 = arith.divf %145, %146 : vector<8x32xf32>
    %148 = vector.extract_strided_slice %136 {offsets = [0, 32], sizes = [8, 32], strides = [1, 1]} : vector<8x96xf32> to vector<8x32xf32>
    %149 = vector.extract_strided_slice %139 {offsets = [0, 32], sizes = [8, 32], strides = [1, 1]} : vector<8x96xf32> to vector<8x32xf32>
    %150 = arith.addf %148, %149 : vector<8x32xf32>
    %151 = arith.negf %150 : vector<8x32xf32>
    %152 = math.exp %151 : vector<8x32xf32>
    %cst_29 = arith.constant 1.000000e+00 : f32
    %153 = vector.broadcast %cst_29 : f32 to vector<8x32xf32>
    %154 = arith.addf %153, %152 : vector<8x32xf32>
    %155 = arith.divf %153, %154 : vector<8x32xf32>
    %156 = vector.extract_strided_slice %136 {offsets = [0, 64], sizes = [8, 32], strides = [1, 1]} : vector<8x96xf32> to vector<8x32xf32>
    %157 = vector.extract_strided_slice %139 {offsets = [0, 64], sizes = [8, 32], strides = [1, 1]} : vector<8x96xf32> to vector<8x32xf32>
    %158 = arith.mulf %147, %157 : vector<8x32xf32>
    %159 = arith.addf %156, %158 : vector<8x32xf32>
    %160 = math.tanh %159 : vector<8x32xf32>
    %cst_30 = arith.constant 1.000000e+00 : f32
    %161 = vector.broadcast %cst_30 : f32 to vector<8x32xf32>
    %162 = arith.subf %161, %155 : vector<8x32xf32>
    %163 = arith.mulf %162, %160 : vector<8x32xf32>
    %164 = arith.mulf %155, %135 : vector<8x32xf32>
    %165 = arith.addf %163, %164 : vector<8x32xf32>
    %166 = vector.extract_strided_slice %12 {offsets = [40, 0], sizes = [8, 96], strides = [1, 1]} : vector<64x96xf32> to vector<8x96xf32>
    %cst_31 = arith.constant dense<0.000000e+00> : vector<8x96xf32>
    %167 = tpu.matmul %165, %13, %cst_31 {dimension_numbers = #tpu.dot_dimension_numbers<[1], [0], [0], [1], [0, 0, 1, 1], [], []>} : vector<8x32xf32>, vector<32x96xf32>, vector<8x96xf32> -> vector<8x96xf32>
    %168 = vector.broadcast %14 : vector<1x96xf32> to vector<8x96xf32>
    %169 = arith.addf %167, %168 : vector<8x96xf32>
    %170 = vector.extract_strided_slice %166 {offsets = [0, 0], sizes = [8, 32], strides = [1, 1]} : vector<8x96xf32> to vector<8x32xf32>
    %171 = vector.extract_strided_slice %169 {offsets = [0, 0], sizes = [8, 32], strides = [1, 1]} : vector<8x96xf32> to vector<8x32xf32>
    %172 = arith.addf %170, %171 : vector<8x32xf32>
    %173 = arith.negf %172 : vector<8x32xf32>
    %174 = math.exp %173 : vector<8x32xf32>
    %cst_32 = arith.constant 1.000000e+00 : f32
    %175 = vector.broadcast %cst_32 : f32 to vector<8x32xf32>
    %176 = arith.addf %175, %174 : vector<8x32xf32>
    %177 = arith.divf %175, %176 : vector<8x32xf32>
    %178 = vector.extract_strided_slice %166 {offsets = [0, 32], sizes = [8, 32], strides = [1, 1]} : vector<8x96xf32> to vector<8x32xf32>
    %179 = vector.extract_strided_slice %169 {offsets = [0, 32], sizes = [8, 32], strides = [1, 1]} : vector<8x96xf32> to vector<8x32xf32>
    %180 = arith.addf %178, %179 : vector<8x32xf32>
    %181 = arith.negf %180 : vector<8x32xf32>
    %182 = math.exp %181 : vector<8x32xf32>
    %cst_33 = arith.constant 1.000000e+00 : f32
    %183 = vector.broadcast %cst_33 : f32 to vector<8x32xf32>
    %184 = arith.addf %183, %182 : vector<8x32xf32>
    %185 = arith.divf %183, %184 : vector<8x32xf32>
    %186 = vector.extract_strided_slice %166 {offsets = [0, 64], sizes = [8, 32], strides = [1, 1]} : vector<8x96xf32> to vector<8x32xf32>
    %187 = vector.extract_strided_slice %169 {offsets = [0, 64], sizes = [8, 32], strides = [1, 1]} : vector<8x96xf32> to vector<8x32xf32>
    %188 = arith.mulf %177, %187 : vector<8x32xf32>
    %189 = arith.addf %186, %188 : vector<8x32xf32>
    %190 = math.tanh %189 : vector<8x32xf32>
    %cst_34 = arith.constant 1.000000e+00 : f32
    %191 = vector.broadcast %cst_34 : f32 to vector<8x32xf32>
    %192 = arith.subf %191, %185 : vector<8x32xf32>
    %193 = arith.mulf %192, %190 : vector<8x32xf32>
    %194 = arith.mulf %185, %165 : vector<8x32xf32>
    %195 = arith.addf %193, %194 : vector<8x32xf32>
    %196 = vector.extract_strided_slice %12 {offsets = [48, 0], sizes = [8, 96], strides = [1, 1]} : vector<64x96xf32> to vector<8x96xf32>
    %cst_35 = arith.constant dense<0.000000e+00> : vector<8x96xf32>
    %197 = tpu.matmul %195, %13, %cst_35 {dimension_numbers = #tpu.dot_dimension_numbers<[1], [0], [0], [1], [0, 0, 1, 1], [], []>} : vector<8x32xf32>, vector<32x96xf32>, vector<8x96xf32> -> vector<8x96xf32>
    %198 = vector.broadcast %14 : vector<1x96xf32> to vector<8x96xf32>
    %199 = arith.addf %197, %198 : vector<8x96xf32>
    %200 = vector.extract_strided_slice %196 {offsets = [0, 0], sizes = [8, 32], strides = [1, 1]} : vector<8x96xf32> to vector<8x32xf32>
    %201 = vector.extract_strided_slice %199 {offsets = [0, 0], sizes = [8, 32], strides = [1, 1]} : vector<8x96xf32> to vector<8x32xf32>
    %202 = arith.addf %200, %201 : vector<8x32xf32>
    %203 = arith.negf %202 : vector<8x32xf32>
    %204 = math.exp %203 : vector<8x32xf32>
    %cst_36 = arith.constant 1.000000e+00 : f32
    %205 = vector.broadcast %cst_36 : f32 to vector<8x32xf32>
    %206 = arith.addf %205, %204 : vector<8x32xf32>
    %207 = arith.divf %205, %206 : vector<8x32xf32>
    %208 = vector.extract_strided_slice %196 {offsets = [0, 32], sizes = [8, 32], strides = [1, 1]} : vector<8x96xf32> to vector<8x32xf32>
    %209 = vector.extract_strided_slice %199 {offsets = [0, 32], sizes = [8, 32], strides = [1, 1]} : vector<8x96xf32> to vector<8x32xf32>
    %210 = arith.addf %208, %209 : vector<8x32xf32>
    %211 = arith.negf %210 : vector<8x32xf32>
    %212 = math.exp %211 : vector<8x32xf32>
    %cst_37 = arith.constant 1.000000e+00 : f32
    %213 = vector.broadcast %cst_37 : f32 to vector<8x32xf32>
    %214 = arith.addf %213, %212 : vector<8x32xf32>
    %215 = arith.divf %213, %214 : vector<8x32xf32>
    %216 = vector.extract_strided_slice %196 {offsets = [0, 64], sizes = [8, 32], strides = [1, 1]} : vector<8x96xf32> to vector<8x32xf32>
    %217 = vector.extract_strided_slice %199 {offsets = [0, 64], sizes = [8, 32], strides = [1, 1]} : vector<8x96xf32> to vector<8x32xf32>
    %218 = arith.mulf %207, %217 : vector<8x32xf32>
    %219 = arith.addf %216, %218 : vector<8x32xf32>
    %220 = math.tanh %219 : vector<8x32xf32>
    %cst_38 = arith.constant 1.000000e+00 : f32
    %221 = vector.broadcast %cst_38 : f32 to vector<8x32xf32>
    %222 = arith.subf %221, %215 : vector<8x32xf32>
    %223 = arith.mulf %222, %220 : vector<8x32xf32>
    %224 = arith.mulf %215, %195 : vector<8x32xf32>
    %225 = arith.addf %223, %224 : vector<8x32xf32>
    %226 = vector.extract_strided_slice %12 {offsets = [56, 0], sizes = [8, 96], strides = [1, 1]} : vector<64x96xf32> to vector<8x96xf32>
    %cst_39 = arith.constant dense<0.000000e+00> : vector<8x96xf32>
    %227 = tpu.matmul %225, %13, %cst_39 {dimension_numbers = #tpu.dot_dimension_numbers<[1], [0], [0], [1], [0, 0, 1, 1], [], []>} : vector<8x32xf32>, vector<32x96xf32>, vector<8x96xf32> -> vector<8x96xf32>
    %228 = vector.broadcast %14 : vector<1x96xf32> to vector<8x96xf32>
    %229 = arith.addf %227, %228 : vector<8x96xf32>
    %230 = vector.extract_strided_slice %226 {offsets = [0, 0], sizes = [8, 32], strides = [1, 1]} : vector<8x96xf32> to vector<8x32xf32>
    %231 = vector.extract_strided_slice %229 {offsets = [0, 0], sizes = [8, 32], strides = [1, 1]} : vector<8x96xf32> to vector<8x32xf32>
    %232 = arith.addf %230, %231 : vector<8x32xf32>
    %233 = arith.negf %232 : vector<8x32xf32>
    %234 = math.exp %233 : vector<8x32xf32>
    %cst_40 = arith.constant 1.000000e+00 : f32
    %235 = vector.broadcast %cst_40 : f32 to vector<8x32xf32>
    %236 = arith.addf %235, %234 : vector<8x32xf32>
    %237 = arith.divf %235, %236 : vector<8x32xf32>
    %238 = vector.extract_strided_slice %226 {offsets = [0, 32], sizes = [8, 32], strides = [1, 1]} : vector<8x96xf32> to vector<8x32xf32>
    %239 = vector.extract_strided_slice %229 {offsets = [0, 32], sizes = [8, 32], strides = [1, 1]} : vector<8x96xf32> to vector<8x32xf32>
    %240 = arith.addf %238, %239 : vector<8x32xf32>
    %241 = arith.negf %240 : vector<8x32xf32>
    %242 = math.exp %241 : vector<8x32xf32>
    %cst_41 = arith.constant 1.000000e+00 : f32
    %243 = vector.broadcast %cst_41 : f32 to vector<8x32xf32>
    %244 = arith.addf %243, %242 : vector<8x32xf32>
    %245 = arith.divf %243, %244 : vector<8x32xf32>
    %246 = vector.extract_strided_slice %226 {offsets = [0, 64], sizes = [8, 32], strides = [1, 1]} : vector<8x96xf32> to vector<8x32xf32>
    %247 = vector.extract_strided_slice %229 {offsets = [0, 64], sizes = [8, 32], strides = [1, 1]} : vector<8x96xf32> to vector<8x32xf32>
    %248 = arith.mulf %237, %247 : vector<8x32xf32>
    %249 = arith.addf %246, %248 : vector<8x32xf32>
    %250 = math.tanh %249 : vector<8x32xf32>
    %cst_42 = arith.constant 1.000000e+00 : f32
    %251 = vector.broadcast %cst_42 : f32 to vector<8x32xf32>
    %252 = arith.subf %251, %245 : vector<8x32xf32>
    %253 = arith.mulf %252, %250 : vector<8x32xf32>
    %254 = arith.mulf %245, %225 : vector<8x32xf32>
    %255 = arith.addf %253, %254 : vector<8x32xf32>
    %256 = vector.extract_strided_slice %255 {offsets = [0, 0], sizes = [4, 16], strides = [1, 1]} : vector<8x32xf32> to vector<4x16xf32>
    %257 = vector.extract_strided_slice %255 {offsets = [4, 0], sizes = [1, 16], strides = [1, 1]} : vector<8x32xf32> to vector<1x16xf32>
    %258 = vector.extract_strided_slice %255 {offsets = [0, 16], sizes = [1, 16], strides = [1, 1]} : vector<8x32xf32> to vector<1x16xf32>
    %c64 = arith.constant 64 : index
    %c0_43 = arith.constant 0 : index
    %259 = vector.load %arg1[%c64, %c0_43] : memref<80x12xf32, #tpu.memory_space<vmem>>, vector<4x4xf32>
    %c104 = arith.constant 104 : index
    %c0_44 = arith.constant 0 : index
    %260 = vector.load %arg0[%c104, %c0_44] : memref<328x144xf32, #tpu.memory_space<vmem>>, vector<16x16xf32>
    %cst_45 = arith.constant dense<0.000000e+00> : vector<4x16xf32>
    %261 = tpu.matmul %256, %260, %cst_45 {dimension_numbers = #tpu.dot_dimension_numbers<[1], [0], [0], [1], [0, 0, 1, 1], [], []>} : vector<4x16xf32>, vector<16x16xf32>, vector<4x16xf32> -> vector<4x16xf32>
    %cst_46 = arith.constant dense<0.000000e+00> : vector<4x16xf32>
    %262 = tpu.matmul %259, %261, %cst_46 {dimension_numbers = #tpu.dot_dimension_numbers<[1], [0], [0], [1], [0, 0, 1, 1], [], []>} : vector<4x4xf32>, vector<4x16xf32>, vector<4x16xf32> -> vector<4x16xf32>
    %c120 = arith.constant 120 : index
    %c0_47 = arith.constant 0 : index
    %263 = vector.load %arg0[%c120, %c0_47] : memref<328x144xf32, #tpu.memory_space<vmem>>, vector<1x16xf32>
    %264 = vector.broadcast %263 : vector<1x16xf32> to vector<4x16xf32>
    %265 = arith.addf %262, %264 : vector<4x16xf32>
    %cst_48 = arith.constant 0.000000e+00 : f32
    %266 = vector.broadcast %cst_48 : f32 to vector<4x16xf32>
    %267 = arith.maximumf %265, %266 : vector<4x16xf32>
    %c128 = arith.constant 128 : index
    %c0_49 = arith.constant 0 : index
    %268 = vector.load %arg0[%c128, %c0_49] : memref<328x144xf32, #tpu.memory_space<vmem>>, vector<16x16xf32>
    %cst_50 = arith.constant dense<0.000000e+00> : vector<4x16xf32>
    %269 = tpu.matmul %267, %268, %cst_50 {dimension_numbers = #tpu.dot_dimension_numbers<[1], [0], [0], [1], [0, 0, 1, 1], [], []>} : vector<4x16xf32>, vector<16x16xf32>, vector<4x16xf32> -> vector<4x16xf32>
    %cst_51 = arith.constant dense<0.000000e+00> : vector<4x16xf32>
    %270 = tpu.matmul %259, %269, %cst_51 {dimension_numbers = #tpu.dot_dimension_numbers<[1], [0], [0], [1], [0, 0, 1, 1], [], []>} : vector<4x4xf32>, vector<4x16xf32>, vector<4x16xf32> -> vector<4x16xf32>
    %c144 = arith.constant 144 : index
    %c0_52 = arith.constant 0 : index
    %271 = vector.load %arg0[%c144, %c0_52] : memref<328x144xf32, #tpu.memory_space<vmem>>, vector<1x16xf32>
    %272 = vector.broadcast %271 : vector<1x16xf32> to vector<4x16xf32>
    %273 = arith.addf %270, %272 : vector<4x16xf32>
    %274 = vector.extract_strided_slice %273 {offsets = [0, 0], sizes = [1, 16], strides = [1, 1]} : vector<4x16xf32> to vector<1x16xf32>
    %c152 = arith.constant 152 : index
    %c0_53 = arith.constant 0 : index
    %275 = vector.load %arg0[%c152, %c0_53] : memref<328x144xf32, #tpu.memory_space<vmem>>, vector<48x144xf32>
    %c200 = arith.constant 200 : index
    %c0_54 = arith.constant 0 : index
    %276 = vector.load %arg0[%c200, %c0_54] : memref<328x144xf32, #tpu.memory_space<vmem>>, vector<48x144xf32>
    %c248 = arith.constant 248 : index
    %c0_55 = arith.constant 0 : index
    %277 = vector.load %arg0[%c248, %c0_55] : memref<328x144xf32, #tpu.memory_space<vmem>>, vector<1x144xf32>
    %c256 = arith.constant 256 : index
    %c0_56 = arith.constant 0 : index
    %278 = vector.load %arg0[%c256, %c0_56] : memref<328x144xf32, #tpu.memory_space<vmem>>, vector<1x144xf32>
    %279 = tpu.concatenate %274, %257, %258 in 1 : vector<1x16xf32>, vector<1x16xf32>, vector<1x16xf32> -> vector<1x48xf32>
    %cst_57 = arith.constant dense<0.000000e+00> : vector<1x144xf32>
    %280 = tpu.matmul %279, %275, %cst_57 {dimension_numbers = #tpu.dot_dimension_numbers<[1], [0], [0], [1], [0, 0, 1, 1], [], []>} : vector<1x48xf32>, vector<48x144xf32>, vector<1x144xf32> -> vector<1x144xf32>
    %281 = arith.addf %280, %277 : vector<1x144xf32>
    %cst_58 = arith.constant 0.000000e+00 : f32
    %282 = vector.broadcast %cst_58 : f32 to vector<1x48xf32>
    %cst_59 = arith.constant dense<0.000000e+00> : vector<1x144xf32>
    %283 = tpu.matmul %282, %276, %cst_59 {dimension_numbers = #tpu.dot_dimension_numbers<[1], [0], [0], [1], [0, 0, 1, 1], [], []>} : vector<1x48xf32>, vector<48x144xf32>, vector<1x144xf32> -> vector<1x144xf32>
    %284 = arith.addf %283, %278 : vector<1x144xf32>
    %285 = vector.extract_strided_slice %281 {offsets = [0, 0], sizes = [1, 48], strides = [1, 1]} : vector<1x144xf32> to vector<1x48xf32>
    %286 = vector.extract_strided_slice %284 {offsets = [0, 0], sizes = [1, 48], strides = [1, 1]} : vector<1x144xf32> to vector<1x48xf32>
    %287 = arith.addf %285, %286 : vector<1x48xf32>
    %288 = arith.negf %287 : vector<1x48xf32>
    %289 = math.exp %288 : vector<1x48xf32>
    %cst_60 = arith.constant 1.000000e+00 : f32
    %290 = vector.broadcast %cst_60 : f32 to vector<1x48xf32>
    %291 = arith.addf %290, %289 : vector<1x48xf32>
    %292 = arith.divf %290, %291 : vector<1x48xf32>
    %293 = vector.extract_strided_slice %281 {offsets = [0, 48], sizes = [1, 48], strides = [1, 1]} : vector<1x144xf32> to vector<1x48xf32>
    %294 = vector.extract_strided_slice %284 {offsets = [0, 48], sizes = [1, 48], strides = [1, 1]} : vector<1x144xf32> to vector<1x48xf32>
    %295 = arith.addf %293, %294 : vector<1x48xf32>
    %296 = arith.negf %295 : vector<1x48xf32>
    %297 = math.exp %296 : vector<1x48xf32>
    %cst_61 = arith.constant 1.000000e+00 : f32
    %298 = vector.broadcast %cst_61 : f32 to vector<1x48xf32>
    %299 = arith.addf %298, %297 : vector<1x48xf32>
    %300 = arith.divf %298, %299 : vector<1x48xf32>
    %301 = vector.extract_strided_slice %281 {offsets = [0, 96], sizes = [1, 48], strides = [1, 1]} : vector<1x144xf32> to vector<1x48xf32>
    %302 = vector.extract_strided_slice %284 {offsets = [0, 96], sizes = [1, 48], strides = [1, 1]} : vector<1x144xf32> to vector<1x48xf32>
    %303 = arith.mulf %292, %302 : vector<1x48xf32>
    %304 = arith.addf %301, %303 : vector<1x48xf32>
    %305 = math.tanh %304 : vector<1x48xf32>
    %cst_62 = arith.constant 1.000000e+00 : f32
    %306 = vector.broadcast %cst_62 : f32 to vector<1x48xf32>
    %307 = arith.subf %306, %300 : vector<1x48xf32>
    %308 = arith.mulf %307, %305 : vector<1x48xf32>
    %309 = arith.mulf %300, %282 : vector<1x48xf32>
    %310 = arith.addf %308, %309 : vector<1x48xf32>
    %cst_63 = arith.constant dense<0.000000e+00> : vector<1x144xf32>
    %311 = tpu.matmul %310, %276, %cst_63 {dimension_numbers = #tpu.dot_dimension_numbers<[1], [0], [0], [1], [0, 0, 1, 1], [], []>} : vector<1x48xf32>, vector<48x144xf32>, vector<1x144xf32> -> vector<1x144xf32>
    %312 = arith.addf %311, %278 : vector<1x144xf32>
    %313 = vector.extract_strided_slice %277 {offsets = [0, 0], sizes = [1, 48], strides = [1, 1]} : vector<1x144xf32> to vector<1x48xf32>
    %314 = vector.extract_strided_slice %312 {offsets = [0, 0], sizes = [1, 48], strides = [1, 1]} : vector<1x144xf32> to vector<1x48xf32>
    %315 = arith.addf %313, %314 : vector<1x48xf32>
    %316 = arith.negf %315 : vector<1x48xf32>
    %317 = math.exp %316 : vector<1x48xf32>
    %cst_64 = arith.constant 1.000000e+00 : f32
    %318 = vector.broadcast %cst_64 : f32 to vector<1x48xf32>
    %319 = arith.addf %318, %317 : vector<1x48xf32>
    %320 = arith.divf %318, %319 : vector<1x48xf32>
    %321 = vector.extract_strided_slice %277 {offsets = [0, 48], sizes = [1, 48], strides = [1, 1]} : vector<1x144xf32> to vector<1x48xf32>
    %322 = vector.extract_strided_slice %312 {offsets = [0, 48], sizes = [1, 48], strides = [1, 1]} : vector<1x144xf32> to vector<1x48xf32>
    %323 = arith.addf %321, %322 : vector<1x48xf32>
    %324 = arith.negf %323 : vector<1x48xf32>
    %325 = math.exp %324 : vector<1x48xf32>
    %cst_65 = arith.constant 1.000000e+00 : f32
    %326 = vector.broadcast %cst_65 : f32 to vector<1x48xf32>
    %327 = arith.addf %326, %325 : vector<1x48xf32>
    %328 = arith.divf %326, %327 : vector<1x48xf32>
    %329 = vector.extract_strided_slice %277 {offsets = [0, 96], sizes = [1, 48], strides = [1, 1]} : vector<1x144xf32> to vector<1x48xf32>
    %330 = vector.extract_strided_slice %312 {offsets = [0, 96], sizes = [1, 48], strides = [1, 1]} : vector<1x144xf32> to vector<1x48xf32>
    %331 = arith.mulf %320, %330 : vector<1x48xf32>
    %332 = arith.addf %329, %331 : vector<1x48xf32>
    %333 = math.tanh %332 : vector<1x48xf32>
    %cst_66 = arith.constant 1.000000e+00 : f32
    %334 = vector.broadcast %cst_66 : f32 to vector<1x48xf32>
    %335 = arith.subf %334, %328 : vector<1x48xf32>
    %336 = arith.mulf %335, %333 : vector<1x48xf32>
    %337 = arith.mulf %328, %310 : vector<1x48xf32>
    %338 = arith.addf %336, %337 : vector<1x48xf32>
    %cst_67 = arith.constant dense<0.000000e+00> : vector<1x144xf32>
    %339 = tpu.matmul %338, %276, %cst_67 {dimension_numbers = #tpu.dot_dimension_numbers<[1], [0], [0], [1], [0, 0, 1, 1], [], []>} : vector<1x48xf32>, vector<48x144xf32>, vector<1x144xf32> -> vector<1x144xf32>
    %340 = arith.addf %339, %278 : vector<1x144xf32>
    %341 = vector.extract_strided_slice %277 {offsets = [0, 0], sizes = [1, 48], strides = [1, 1]} : vector<1x144xf32> to vector<1x48xf32>
    %342 = vector.extract_strided_slice %340 {offsets = [0, 0], sizes = [1, 48], strides = [1, 1]} : vector<1x144xf32> to vector<1x48xf32>
    %343 = arith.addf %341, %342 : vector<1x48xf32>
    %344 = arith.negf %343 : vector<1x48xf32>
    %345 = math.exp %344 : vector<1x48xf32>
    %cst_68 = arith.constant 1.000000e+00 : f32
    %346 = vector.broadcast %cst_68 : f32 to vector<1x48xf32>
    %347 = arith.addf %346, %345 : vector<1x48xf32>
    %348 = arith.divf %346, %347 : vector<1x48xf32>
    %349 = vector.extract_strided_slice %277 {offsets = [0, 48], sizes = [1, 48], strides = [1, 1]} : vector<1x144xf32> to vector<1x48xf32>
    %350 = vector.extract_strided_slice %340 {offsets = [0, 48], sizes = [1, 48], strides = [1, 1]} : vector<1x144xf32> to vector<1x48xf32>
    %351 = arith.addf %349, %350 : vector<1x48xf32>
    %352 = arith.negf %351 : vector<1x48xf32>
    %353 = math.exp %352 : vector<1x48xf32>
    %cst_69 = arith.constant 1.000000e+00 : f32
    %354 = vector.broadcast %cst_69 : f32 to vector<1x48xf32>
    %355 = arith.addf %354, %353 : vector<1x48xf32>
    %356 = arith.divf %354, %355 : vector<1x48xf32>
    %357 = vector.extract_strided_slice %277 {offsets = [0, 96], sizes = [1, 48], strides = [1, 1]} : vector<1x144xf32> to vector<1x48xf32>
    %358 = vector.extract_strided_slice %340 {offsets = [0, 96], sizes = [1, 48], strides = [1, 1]} : vector<1x144xf32> to vector<1x48xf32>
    %359 = arith.mulf %348, %358 : vector<1x48xf32>
    %360 = arith.addf %357, %359 : vector<1x48xf32>
    %361 = math.tanh %360 : vector<1x48xf32>
    %cst_70 = arith.constant 1.000000e+00 : f32
    %362 = vector.broadcast %cst_70 : f32 to vector<1x48xf32>
    %363 = arith.subf %362, %356 : vector<1x48xf32>
    %364 = arith.mulf %363, %361 : vector<1x48xf32>
    %365 = arith.mulf %356, %338 : vector<1x48xf32>
    %366 = arith.addf %364, %365 : vector<1x48xf32>
    %cst_71 = arith.constant dense<0.000000e+00> : vector<1x144xf32>
    %367 = tpu.matmul %366, %276, %cst_71 {dimension_numbers = #tpu.dot_dimension_numbers<[1], [0], [0], [1], [0, 0, 1, 1], [], []>} : vector<1x48xf32>, vector<48x144xf32>, vector<1x144xf32> -> vector<1x144xf32>
    %368 = arith.addf %367, %278 : vector<1x144xf32>
    %369 = vector.extract_strided_slice %277 {offsets = [0, 0], sizes = [1, 48], strides = [1, 1]} : vector<1x144xf32> to vector<1x48xf32>
    %370 = vector.extract_strided_slice %368 {offsets = [0, 0], sizes = [1, 48], strides = [1, 1]} : vector<1x144xf32> to vector<1x48xf32>
    %371 = arith.addf %369, %370 : vector<1x48xf32>
    %372 = arith.negf %371 : vector<1x48xf32>
    %373 = math.exp %372 : vector<1x48xf32>
    %cst_72 = arith.constant 1.000000e+00 : f32
    %374 = vector.broadcast %cst_72 : f32 to vector<1x48xf32>
    %375 = arith.addf %374, %373 : vector<1x48xf32>
    %376 = arith.divf %374, %375 : vector<1x48xf32>
    %377 = vector.extract_strided_slice %277 {offsets = [0, 48], sizes = [1, 48], strides = [1, 1]} : vector<1x144xf32> to vector<1x48xf32>
    %378 = vector.extract_strided_slice %368 {offsets = [0, 48], sizes = [1, 48], strides = [1, 1]} : vector<1x144xf32> to vector<1x48xf32>
    %379 = arith.addf %377, %378 : vector<1x48xf32>
    %380 = arith.negf %379 : vector<1x48xf32>
    %381 = math.exp %380 : vector<1x48xf32>
    %cst_73 = arith.constant 1.000000e+00 : f32
    %382 = vector.broadcast %cst_73 : f32 to vector<1x48xf32>
    %383 = arith.addf %382, %381 : vector<1x48xf32>
    %384 = arith.divf %382, %383 : vector<1x48xf32>
    %385 = vector.extract_strided_slice %277 {offsets = [0, 96], sizes = [1, 48], strides = [1, 1]} : vector<1x144xf32> to vector<1x48xf32>
    %386 = vector.extract_strided_slice %368 {offsets = [0, 96], sizes = [1, 48], strides = [1, 1]} : vector<1x144xf32> to vector<1x48xf32>
    %387 = arith.mulf %376, %386 : vector<1x48xf32>
    %388 = arith.addf %385, %387 : vector<1x48xf32>
    %389 = math.tanh %388 : vector<1x48xf32>
    %cst_74 = arith.constant 1.000000e+00 : f32
    %390 = vector.broadcast %cst_74 : f32 to vector<1x48xf32>
    %391 = arith.subf %390, %384 : vector<1x48xf32>
    %392 = arith.mulf %391, %389 : vector<1x48xf32>
    %393 = arith.mulf %384, %366 : vector<1x48xf32>
    %394 = arith.addf %392, %393 : vector<1x48xf32>
    %cst_75 = arith.constant dense<0.000000e+00> : vector<1x144xf32>
    %395 = tpu.matmul %394, %276, %cst_75 {dimension_numbers = #tpu.dot_dimension_numbers<[1], [0], [0], [1], [0, 0, 1, 1], [], []>} : vector<1x48xf32>, vector<48x144xf32>, vector<1x144xf32> -> vector<1x144xf32>
    %396 = arith.addf %395, %278 : vector<1x144xf32>
    %397 = vector.extract_strided_slice %277 {offsets = [0, 0], sizes = [1, 48], strides = [1, 1]} : vector<1x144xf32> to vector<1x48xf32>
    %398 = vector.extract_strided_slice %396 {offsets = [0, 0], sizes = [1, 48], strides = [1, 1]} : vector<1x144xf32> to vector<1x48xf32>
    %399 = arith.addf %397, %398 : vector<1x48xf32>
    %400 = arith.negf %399 : vector<1x48xf32>
    %401 = math.exp %400 : vector<1x48xf32>
    %cst_76 = arith.constant 1.000000e+00 : f32
    %402 = vector.broadcast %cst_76 : f32 to vector<1x48xf32>
    %403 = arith.addf %402, %401 : vector<1x48xf32>
    %404 = arith.divf %402, %403 : vector<1x48xf32>
    %405 = vector.extract_strided_slice %277 {offsets = [0, 48], sizes = [1, 48], strides = [1, 1]} : vector<1x144xf32> to vector<1x48xf32>
    %406 = vector.extract_strided_slice %396 {offsets = [0, 48], sizes = [1, 48], strides = [1, 1]} : vector<1x144xf32> to vector<1x48xf32>
    %407 = arith.addf %405, %406 : vector<1x48xf32>
    %408 = arith.negf %407 : vector<1x48xf32>
    %409 = math.exp %408 : vector<1x48xf32>
    %cst_77 = arith.constant 1.000000e+00 : f32
    %410 = vector.broadcast %cst_77 : f32 to vector<1x48xf32>
    %411 = arith.addf %410, %409 : vector<1x48xf32>
    %412 = arith.divf %410, %411 : vector<1x48xf32>
    %413 = vector.extract_strided_slice %277 {offsets = [0, 96], sizes = [1, 48], strides = [1, 1]} : vector<1x144xf32> to vector<1x48xf32>
    %414 = vector.extract_strided_slice %396 {offsets = [0, 96], sizes = [1, 48], strides = [1, 1]} : vector<1x144xf32> to vector<1x48xf32>
    %415 = arith.mulf %404, %414 : vector<1x48xf32>
    %416 = arith.addf %413, %415 : vector<1x48xf32>
    %417 = math.tanh %416 : vector<1x48xf32>
    %cst_78 = arith.constant 1.000000e+00 : f32
    %418 = vector.broadcast %cst_78 : f32 to vector<1x48xf32>
    %419 = arith.subf %418, %412 : vector<1x48xf32>
    %420 = arith.mulf %419, %417 : vector<1x48xf32>
    %421 = arith.mulf %412, %394 : vector<1x48xf32>
    %422 = arith.addf %420, %421 : vector<1x48xf32>
    %cst_79 = arith.constant dense<0.000000e+00> : vector<1x144xf32>
    %423 = tpu.matmul %422, %276, %cst_79 {dimension_numbers = #tpu.dot_dimension_numbers<[1], [0], [0], [1], [0, 0, 1, 1], [], []>} : vector<1x48xf32>, vector<48x144xf32>, vector<1x144xf32> -> vector<1x144xf32>
    %424 = arith.addf %423, %278 : vector<1x144xf32>
    %425 = vector.extract_strided_slice %277 {offsets = [0, 0], sizes = [1, 48], strides = [1, 1]} : vector<1x144xf32> to vector<1x48xf32>
    %426 = vector.extract_strided_slice %424 {offsets = [0, 0], sizes = [1, 48], strides = [1, 1]} : vector<1x144xf32> to vector<1x48xf32>
    %427 = arith.addf %425, %426 : vector<1x48xf32>
    %428 = arith.negf %427 : vector<1x48xf32>
    %429 = math.exp %428 : vector<1x48xf32>
    %cst_80 = arith.constant 1.000000e+00 : f32
    %430 = vector.broadcast %cst_80 : f32 to vector<1x48xf32>
    %431 = arith.addf %430, %429 : vector<1x48xf32>
    %432 = arith.divf %430, %431 : vector<1x48xf32>
    %433 = vector.extract_strided_slice %277 {offsets = [0, 48], sizes = [1, 48], strides = [1, 1]} : vector<1x144xf32> to vector<1x48xf32>
    %434 = vector.extract_strided_slice %424 {offsets = [0, 48], sizes = [1, 48], strides = [1, 1]} : vector<1x144xf32> to vector<1x48xf32>
    %435 = arith.addf %433, %434 : vector<1x48xf32>
    %436 = arith.negf %435 : vector<1x48xf32>
    %437 = math.exp %436 : vector<1x48xf32>
    %cst_81 = arith.constant 1.000000e+00 : f32
    %438 = vector.broadcast %cst_81 : f32 to vector<1x48xf32>
    %439 = arith.addf %438, %437 : vector<1x48xf32>
    %440 = arith.divf %438, %439 : vector<1x48xf32>
    %441 = vector.extract_strided_slice %277 {offsets = [0, 96], sizes = [1, 48], strides = [1, 1]} : vector<1x144xf32> to vector<1x48xf32>
    %442 = vector.extract_strided_slice %424 {offsets = [0, 96], sizes = [1, 48], strides = [1, 1]} : vector<1x144xf32> to vector<1x48xf32>
    %443 = arith.mulf %432, %442 : vector<1x48xf32>
    %444 = arith.addf %441, %443 : vector<1x48xf32>
    %445 = math.tanh %444 : vector<1x48xf32>
    %cst_82 = arith.constant 1.000000e+00 : f32
    %446 = vector.broadcast %cst_82 : f32 to vector<1x48xf32>
    %447 = arith.subf %446, %440 : vector<1x48xf32>
    %448 = arith.mulf %447, %445 : vector<1x48xf32>
    %449 = arith.mulf %440, %422 : vector<1x48xf32>
    %450 = arith.addf %448, %449 : vector<1x48xf32>
    %cst_83 = arith.constant dense<0.000000e+00> : vector<1x144xf32>
    %451 = tpu.matmul %450, %276, %cst_83 {dimension_numbers = #tpu.dot_dimension_numbers<[1], [0], [0], [1], [0, 0, 1, 1], [], []>} : vector<1x48xf32>, vector<48x144xf32>, vector<1x144xf32> -> vector<1x144xf32>
    %452 = arith.addf %451, %278 : vector<1x144xf32>
    %453 = vector.extract_strided_slice %277 {offsets = [0, 0], sizes = [1, 48], strides = [1, 1]} : vector<1x144xf32> to vector<1x48xf32>
    %454 = vector.extract_strided_slice %452 {offsets = [0, 0], sizes = [1, 48], strides = [1, 1]} : vector<1x144xf32> to vector<1x48xf32>
    %455 = arith.addf %453, %454 : vector<1x48xf32>
    %456 = arith.negf %455 : vector<1x48xf32>
    %457 = math.exp %456 : vector<1x48xf32>
    %cst_84 = arith.constant 1.000000e+00 : f32
    %458 = vector.broadcast %cst_84 : f32 to vector<1x48xf32>
    %459 = arith.addf %458, %457 : vector<1x48xf32>
    %460 = arith.divf %458, %459 : vector<1x48xf32>
    %461 = vector.extract_strided_slice %277 {offsets = [0, 48], sizes = [1, 48], strides = [1, 1]} : vector<1x144xf32> to vector<1x48xf32>
    %462 = vector.extract_strided_slice %452 {offsets = [0, 48], sizes = [1, 48], strides = [1, 1]} : vector<1x144xf32> to vector<1x48xf32>
    %463 = arith.addf %461, %462 : vector<1x48xf32>
    %464 = arith.negf %463 : vector<1x48xf32>
    %465 = math.exp %464 : vector<1x48xf32>
    %cst_85 = arith.constant 1.000000e+00 : f32
    %466 = vector.broadcast %cst_85 : f32 to vector<1x48xf32>
    %467 = arith.addf %466, %465 : vector<1x48xf32>
    %468 = arith.divf %466, %467 : vector<1x48xf32>
    %469 = vector.extract_strided_slice %277 {offsets = [0, 96], sizes = [1, 48], strides = [1, 1]} : vector<1x144xf32> to vector<1x48xf32>
    %470 = vector.extract_strided_slice %452 {offsets = [0, 96], sizes = [1, 48], strides = [1, 1]} : vector<1x144xf32> to vector<1x48xf32>
    %471 = arith.mulf %460, %470 : vector<1x48xf32>
    %472 = arith.addf %469, %471 : vector<1x48xf32>
    %473 = math.tanh %472 : vector<1x48xf32>
    %cst_86 = arith.constant 1.000000e+00 : f32
    %474 = vector.broadcast %cst_86 : f32 to vector<1x48xf32>
    %475 = arith.subf %474, %468 : vector<1x48xf32>
    %476 = arith.mulf %475, %473 : vector<1x48xf32>
    %477 = arith.mulf %468, %450 : vector<1x48xf32>
    %478 = arith.addf %476, %477 : vector<1x48xf32>
    %cst_87 = arith.constant dense<0.000000e+00> : vector<1x144xf32>
    %479 = tpu.matmul %478, %276, %cst_87 {dimension_numbers = #tpu.dot_dimension_numbers<[1], [0], [0], [1], [0, 0, 1, 1], [], []>} : vector<1x48xf32>, vector<48x144xf32>, vector<1x144xf32> -> vector<1x144xf32>
    %480 = arith.addf %479, %278 : vector<1x144xf32>
    %481 = vector.extract_strided_slice %277 {offsets = [0, 0], sizes = [1, 48], strides = [1, 1]} : vector<1x144xf32> to vector<1x48xf32>
    %482 = vector.extract_strided_slice %480 {offsets = [0, 0], sizes = [1, 48], strides = [1, 1]} : vector<1x144xf32> to vector<1x48xf32>
    %483 = arith.addf %481, %482 : vector<1x48xf32>
    %484 = arith.negf %483 : vector<1x48xf32>
    %485 = math.exp %484 : vector<1x48xf32>
    %cst_88 = arith.constant 1.000000e+00 : f32
    %486 = vector.broadcast %cst_88 : f32 to vector<1x48xf32>
    %487 = arith.addf %486, %485 : vector<1x48xf32>
    %488 = arith.divf %486, %487 : vector<1x48xf32>
    %489 = vector.extract_strided_slice %277 {offsets = [0, 48], sizes = [1, 48], strides = [1, 1]} : vector<1x144xf32> to vector<1x48xf32>
    %490 = vector.extract_strided_slice %480 {offsets = [0, 48], sizes = [1, 48], strides = [1, 1]} : vector<1x144xf32> to vector<1x48xf32>
    %491 = arith.addf %489, %490 : vector<1x48xf32>
    %492 = arith.negf %491 : vector<1x48xf32>
    %493 = math.exp %492 : vector<1x48xf32>
    %cst_89 = arith.constant 1.000000e+00 : f32
    %494 = vector.broadcast %cst_89 : f32 to vector<1x48xf32>
    %495 = arith.addf %494, %493 : vector<1x48xf32>
    %496 = arith.divf %494, %495 : vector<1x48xf32>
    %497 = vector.extract_strided_slice %277 {offsets = [0, 96], sizes = [1, 48], strides = [1, 1]} : vector<1x144xf32> to vector<1x48xf32>
    %498 = vector.extract_strided_slice %480 {offsets = [0, 96], sizes = [1, 48], strides = [1, 1]} : vector<1x144xf32> to vector<1x48xf32>
    %499 = arith.mulf %488, %498 : vector<1x48xf32>
    %500 = arith.addf %497, %499 : vector<1x48xf32>
    %501 = math.tanh %500 : vector<1x48xf32>
    %cst_90 = arith.constant 1.000000e+00 : f32
    %502 = vector.broadcast %cst_90 : f32 to vector<1x48xf32>
    %503 = arith.subf %502, %496 : vector<1x48xf32>
    %504 = arith.mulf %503, %501 : vector<1x48xf32>
    %505 = arith.mulf %496, %478 : vector<1x48xf32>
    %506 = arith.addf %504, %505 : vector<1x48xf32>
    %507 = tpu.concatenate %310, %338, %366, %394, %422, %450, %478, %506 in 0 : vector<1x48xf32>, vector<1x48xf32>, vector<1x48xf32>, vector<1x48xf32>, vector<1x48xf32>, vector<1x48xf32>, vector<1x48xf32>, vector<1x48xf32> -> vector<8x48xf32>
    %c264 = arith.constant 264 : index
    %c0_91 = arith.constant 0 : index
    %508 = vector.load %arg0[%c264, %c0_91] : memref<328x144xf32, #tpu.memory_space<vmem>>, vector<48x2xf32>
    %cst_92 = arith.constant dense<0.000000e+00> : vector<8x2xf32>
    %509 = tpu.matmul %507, %508, %cst_92 {dimension_numbers = #tpu.dot_dimension_numbers<[1], [0], [0], [1], [0, 0, 1, 1], [], []>} : vector<8x48xf32>, vector<48x2xf32>, vector<8x2xf32> -> vector<8x2xf32>
    %c312 = arith.constant 312 : index
    %c0_93 = arith.constant 0 : index
    %510 = vector.load %arg0[%c312, %c0_93] : memref<328x144xf32, #tpu.memory_space<vmem>>, vector<1x2xf32>
    %511 = vector.broadcast %510 : vector<1x2xf32> to vector<8x2xf32>
    %512 = arith.addf %509, %511 : vector<8x2xf32>
    %c320 = arith.constant 320 : index
    %c0_94 = arith.constant 0 : index
    %513 = vector.load %arg0[%c320, %c0_94] : memref<328x144xf32, #tpu.memory_space<vmem>>, vector<8x8xf32>
    %cst_95 = arith.constant dense<0.000000e+00> : vector<8x2xf32>
    %514 = tpu.matmul %513, %512, %cst_95 {dimension_numbers = #tpu.dot_dimension_numbers<[1], [0], [0], [1], [0, 0, 1, 1], [], []>} : vector<8x8xf32>, vector<8x2xf32>, vector<8x2xf32> -> vector<8x2xf32>
    %c72 = arith.constant 72 : index
    %c0_96 = arith.constant 0 : index
    %515 = vector.load %arg1[%c72, %c0_96] : memref<80x12xf32, #tpu.memory_space<vmem>>, vector<1x2xf32>
    %516 = vector.broadcast %515 : vector<1x2xf32> to vector<8x2xf32>
    %517 = arith.addf %516, %514 : vector<8x2xf32>
    %c0_97 = arith.constant 0 : index
    %c0_98 = arith.constant 0 : index
    %518 = vector.load %arg2[%c0_97, %c0_98] : memref<8x2xf32, #tpu.memory_space<vmem>>, vector<8x2xf32>
    tpu.vector_store %arg2[%c0_97, %c0_98], %517 {strides = array<i32>} : memref<8x2xf32, #tpu.memory_space<vmem>>, vector<8x2xf32>,
    return
  }
}

</mosaic_0001>

<llo_original>
// kernel: model_forward.1
$region0: #{model_forward.1}
  #allocation0 [shape = 'u32[]', space=smem, size = 0x4, offset = 0x4, fixed_abs, tag = 'smem constant byte address 0x4 - core index']
  #allocation1 [shape = 'u32[72,128]{1,0:T(1,128)}', space=vmem, size = 0x9000, scoped, tag = 'internal scratch']
  %s0 = inlined_call_operand.vmem [shape: f32[328,144], index: 0, kind: input, shape index: {}]
  %s1 = inlined_call_operand.vmem [shape: f32[80,12], index: 1, kind: input, shape index: {}]
  %s2 = inlined_call_operand.vmem [shape: f32[8,2], index: 2, kind: output, shape index: {}]
  %s3 = sld [smem:[#allocation0]]
  $region18: #{model_forward.1} parent=0
    _
  %s5 = ssub.s32 1, %s3
  %s6 = scalar_select 0, %s5, %s3
  // Predicated region
  $region2: #{model_forward.1} parent=0 // pred_check
    _
  $region3: #{model_forward.1} parent=0 // pred_check_branch
    %8 = sbr.rel (0) target = $region5
  $region4: #{model_forward.1} parent=0 // pred_region
    _
  $region5: #{model_forward.1} parent=0 // pred_fallthru
    _
  // Predicated region
  $region6: #{model_forward.1} parent=0 // pred_check
    _
  $region7: #{model_forward.1} parent=0 // pred_check_branch
    %10 = sbr.rel (0) target = $region9
  $region8: #{model_forward.1} parent=0 // pred_region
    _
  $region9: #{model_forward.1} parent=0 // pred_fallthru
    _
  %v11 = vld [vmem:[%s1] sm:$0xff]
  %v12 = vld [vmem:[%s1 + $0x8] sm:$0xff]
  %v13 = vld [vmem:[%s1 + $0x10] sm:$0xff]
  %v14 = vld [vmem:[%s1 + $0x18] sm:$0xff]
  %v15 = vld [vmem:[%s1 + $0x20] sm:$0xff]
  %v16 = vld [vmem:[%s1 + $0x28] sm:$0xff]
  %v17 = vld [vmem:[%s1 + $0x30] sm:$0xff]
  %v18 = vld [vmem:[%s1 + $0x38] sm:$0xff]
  %v19 = vld [vmem:[%s0] sm:$0xff]
  %v20 = vld [vmem:[%s0 + $0x10] sm:$0xf]
  %v21 = vld [vmem:[%s0 + $0x20] ss:$0 sm:$0xff]
  %vm22 = vcmask 97280
  %v24 = vsel %vm22, %v11, 0
  %v27 = vsel %vm22, %v12, 0
  %v30 = vsel %vm22, %v13, 0
  %v33 = vsel %vm22, %v14, 0
  %v36 = vsel %vm22, %v15, 0
  %v39 = vsel %vm22, %v16, 0
  %v42 = vsel %vm22, %v17, 0
  %v45 = vsel %vm22, %v18, 0
  %vm47 = vcmask 1043456
  %v49 = vsel %vm47, %v20, 0
  %51 = vmatpush.msra.mxu0 0.0
  %52 = vmatpush.msra.mxu0 0.0
  %53 = vmatpush.msra.mxu0 0.0
  %54 = vmatpush.msra.mxu0 0.0
  %55 = vmatpush.msra.mxu0 0.0
  %56 = vmatpush.msra.mxu0 0.0
  %57 = vmatpush.msra.mxu0 0.0
  %58 = vmatpush.msra.mxu0 0.0
  %59 = vmatpush.msra.mxu0 0.0
  %60 = vmatpush.msra.mxu0 0.0
  %61 = vmatpush.msra.mxu0 0.0
  %62 = vmatpush.msra.mxu0 0.0
  %63 = vmatpush.msra.mxu0 0.0
  %64 = vmatpush.msra.mxu0 0.0
  %65 = vmatpush.msra.mxu0 %v49
  %66 = vmatpush.msra.mxu0 %v19
  %67 = vmatmul.f32.gmra.mxu0 %v24
  %v68 = vpop.f32.mrf.mxu0
  %v69 = vadd.f32 %v21, %v68
  %70 = vmatmul.f32.gmra.mxu0 %v27
  %v71 = vpop.f32.mrf.mxu0
  %v72 = vadd.f32 %v21, %v71
  %73 = vmatmul.f32.gmra.mxu0 %v30
  %v74 = vpop.f32.mrf.mxu0
  %v75 = vadd.f32 %v21, %v74
  %76 = vmatmul.f32.gmra.mxu0 %v33
  %v77 = vpop.f32.mrf.mxu0
  %v78 = vadd.f32 %v21, %v77
  %79 = vmatmul.f32.gmra.mxu0 %v36
  %v80 = vpop.f32.mrf.mxu0
  %v81 = vadd.f32 %v21, %v80
  %82 = vmatmul.f32.gmra.mxu0 %v39
  %v83 = vpop.f32.mrf.mxu0
  %v84 = vadd.f32 %v21, %v83
  %85 = vmatmul.f32.gmra.mxu0 %v42
  %v86 = vpop.f32.mrf.mxu0
  %v87 = vadd.f32 %v21, %v86
  %88 = vmatmul.f32.gmra.mxu0 %v45
  %v89 = vpop.f32.mrf.mxu0
  %v90 = vadd.f32 %v21, %v89
  %91 = vdwg.mxu0
  %v92 = vmax.f32 %v69, 0.0
  %v93 = vmax.f32 %v72, 0.0
  %v94 = vmax.f32 %v75, 0.0
  %v95 = vmax.f32 %v78, 0.0
  %v96 = vmax.f32 %v81, 0.0
  %v97 = vmax.f32 %v84, 0.0
  %v98 = vmax.f32 %v87, 0.0
  %v99 = vmax.f32 %v90, 0.0
  %v100 = vld [vmem:[%s0 + $0x30] sm:$0xff]
  %v101 = vld [vmem:[%s0 + $0x40] sm:$0xff]
  %v102 = vld [vmem:[%s0 + $0x50] sm:$0xff]
  %v103 = vld [vmem:[%s0 + $0x60] sm:$0xff]
  %v104 = vld [vmem:[%s0 + $0xb0] ss:$0 sm:$0xff]
  %vm105 = vcmask 261120
  %v107 = vsel %vm105, %v92, 0
  %v110 = vsel %vm105, %v93, 0
  %v113 = vsel %vm105, %v94, 0
  %v116 = vsel %vm105, %v95, 0
  %v119 = vsel %vm105, %v96, 0
  %v122 = vsel %vm105, %v97, 0
  %v125 = vsel %vm105, %v98, 0
  %v128 = vsel %vm105, %v99, 0
  %130 = vmatpush.msra.mxu0 0.0
  %131 = vmatpush.msra.mxu0 0.0
  %132 = vmatpush.msra.mxu0 0.0
  %133 = vmatpush.msra.mxu0 0.0
  %134 = vmatpush.msra.mxu0 0.0
  %135 = vmatpush.msra.mxu0 0.0
  %136 = vmatpush.msra.mxu0 0.0
  %137 = vmatpush.msra.mxu0 0.0
  %138 = vmatpush.msra.mxu0 0.0
  %139 = vmatpush.msra.mxu0 0.0
  %140 = vmatpush.msra.mxu0 0.0
  %141 = vmatpush.msra.mxu0 0.0
  %142 = vmatpush.msra.mxu0 %v103
  %143 = vmatpush.msra.mxu0 %v102
  %144 = vmatpush.msra.mxu0 %v101
  %145 = vmatpush.msra.mxu0 %v100
  %146 = vmatmul.f32.gmra.mxu0 %v107
  %v147 = vpop.f32.mrf.mxu0
  %v148 = vadd.f32 %v104, %v147
  %149 = vmatmul.f32.gmra.mxu0 %v110
  %v150 = vpop.f32.mrf.mxu0
  %v151 = vadd.f32 %v104, %v150
  %152 = vmatmul.f32.gmra.mxu0 %v113
  %v153 = vpop.f32.mrf.mxu0
  %v154 = vadd.f32 %v104, %v153
  %155 = vmatmul.f32.gmra.mxu0 %v116
  %v156 = vpop.f32.mrf.mxu0
  %v157 = vadd.f32 %v104, %v156
  %158 = vmatmul.f32.gmra.mxu0 %v119
  %v159 = vpop.f32.mrf.mxu0
  %v160 = vadd.f32 %v104, %v159
  %161 = vmatmul.f32.gmra.mxu0 %v122
  %v162 = vpop.f32.mrf.mxu0
  %v163 = vadd.f32 %v104, %v162
  %164 = vmatmul.f32.gmra.mxu0 %v125
  %v165 = vpop.f32.mrf.mxu0
  %v166 = vadd.f32 %v104, %v165
  %167 = vmatmul.f32.gmra.mxu0 %v128
  %v168 = vpop.f32.mrf.mxu0
  %v169 = vadd.f32 %v104, %v168
  %170 = vdwg.mxu0
  %v171 = vld [vmem:[%s0 + $0x70] sm:$0xff]
  %v172 = vld [vmem:[%s0 + $0x80] sm:$0xff]
  %v173 = vld [vmem:[%s0 + $0x90] sm:$0xff]
  %v174 = vld [vmem:[%s0 + $0xa0] sm:$0xff]
  %v175 = vld [vmem:[%s0 + $0xc0] ss:$0 sm:$0xff]
  %v177 = vsel %vm105, 0.0, 0
  %179 = vmatpush.msra.mxu0 0.0
  %180 = vmatpush.msra.mxu0 0.0
  %181 = vmatpush.msra.mxu0 0.0
  %182 = vmatpush.msra.mxu0 0.0
  %183 = vmatpush.msra.mxu0 0.0
  %184 = vmatpush.msra.mxu0 0.0
  %185 = vmatpush.msra.mxu0 0.0
  %186 = vmatpush.msra.mxu0 0.0
  %187 = vmatpush.msra.mxu0 0.0
  %188 = vmatpush.msra.mxu0 0.0
  %189 = vmatpush.msra.mxu0 0.0
  %190 = vmatpush.msra.mxu0 0.0
  %191 = vmatpush.msra.mxu0 %v174
  %192 = vmatpush.msra.mxu0 %v173
  %193 = vmatpush.msra.mxu0 %v172
  %194 = vmatpush.msra.mxu0 %v171
  %195 = vmatmul.f32.gmra.mxu0 %v177
  %v196 = vpop.f32.mrf.mxu0
  %v197 = vadd.f32 %v175, %v196
  %198 = vdwg.mxu0
  %v199 = vadd.f32 %v148, %v197
  %v200 = vxor.u32 %v199, 2147483648
  %v201 = vmul.f32 %v200, 1.442695
  %v202 = vpow.pop %v201
  %v203 = vadd.f32 %v202, 1.0
  %v204 = vrcp.pop %v203
  %v205 = vmul.f32 %v203, %v204
  %v206 = vsub.f32 1.0, %v205
  %v207 = vmul.f32 %v204, %v206
  %v208 = vadd.f32 %v204, %v207
  %vm209 = vweird.f32 %v203
  %vm210 = vweird.f32 %v204
  %vm211 = vmor %vm209, %vm210
  %v212 = vsel %vm211, %v204, %v208
  %v213 = vand.u32 2147483647, %v203
  %vm214 = vcmp.eq.f32.partialorder %v213, 8.507059e+37
  %v215 = vand.u32 %v203, 2147483648
  %v216 = vor.u32 1.1754944e-38, %v215
  %v217 = vsel %vm214, %v216, %v212
  %v218 = vmul.f32 1.0, %v217
  %220 = vrot.lane.b32.xlu0 %v197, 64
  %v221 = vpop.permute.xlu0 %220
  %v223 = vmul.f32 %v218, %v221
  %225 = vrot.lane.b32.xlu0 %v223, 64
  %v226 = vpop.permute.xlu0 %225
  %v228 = vadd.f32 %v148, %v226
  %v229 = vtanh.pop %v228
  %v230 = vsub.f32 1.0, %v218
  %232 = vrot.lane.b32.xlu0 %v229, 96
  %v233 = vpop.permute.xlu0 %232
  %v235 = vmul.f32 %v230, %v233
  %v236 = vmul.f32 %v218, 0.0
  %v237 = vadd.f32 %v235, %v236
  %239 = vrot.lane.b32.xlu0 %v237, 96
  %v240 = vpop.permute.xlu0 %239
  %v241 = vsel %vm105, %v240, 0
  %243 = vmatpush.msra.mxu0 0.0
  %244 = vmatpush.msra.mxu0 0.0
  %245 = vmatpush.msra.mxu0 0.0
  %246 = vmatpush.msra.mxu0 0.0
  %247 = vmatpush.msra.mxu0 0.0
  %248 = vmatpush.msra.mxu0 0.0
  %249 = vmatpush.msra.mxu0 0.0
  %250 = vmatpush.msra.mxu0 0.0
  %251 = vmatpush.msra.mxu0 0.0
  %252 = vmatpush.msra.mxu0 0.0
  %253 = vmatpush.msra.mxu0 0.0
  %254 = vmatpush.msra.mxu0 0.0
  %255 = vmatpush.msra.mxu0 %v174
  %256 = vmatpush.msra.mxu0 %v173
  %257 = vmatpush.msra.mxu0 %v172
  %258 = vmatpush.msra.mxu0 %v171
  %259 = vmatmul.f32.gmra.mxu0 %v241
  %v260 = vpop.f32.mrf.mxu0
  %v261 = vadd.f32 %v175, %v260
  %262 = vdwg.mxu0
  %v263 = vadd.f32 %v151, %v261
  %v264 = vxor.u32 %v263, 2147483648
  %v265 = vmul.f32 %v264, 1.442695
  %v266 = vpow.pop %v265
  %v267 = vadd.f32 %v266, 1.0
  %v268 = vrcp.pop %v267
  %v269 = vmul.f32 %v267, %v268
  %v270 = vsub.f32 1.0, %v269
  %v271 = vmul.f32 %v268, %v270
  %v272 = vadd.f32 %v268, %v271
  %vm273 = vweird.f32 %v267
  %vm274 = vweird.f32 %v268
  %vm275 = vmor %vm273, %vm274
  %v276 = vsel %vm275, %v268, %v272
  %v277 = vand.u32 2147483647, %v267
  %vm278 = vcmp.eq.f32.partialorder %v277, 8.507059e+37
  %v279 = vand.u32 %v267, 2147483648
  %v280 = vor.u32 1.1754944e-38, %v279
  %v281 = vsel %vm278, %v280, %v276
  %v282 = vmul.f32 1.0, %v281
  %284 = vrot.lane.b32.xlu0 %v261, 64
  %v285 = vpop.permute.xlu0 %284
  %v287 = vmul.f32 %v282, %v285
  %289 = vrot.lane.b32.xlu0 %v287, 64
  %v290 = vpop.permute.xlu0 %289
  %v292 = vadd.f32 %v151, %v290
  %v293 = vtanh.pop %v292
  %v294 = vsub.f32 1.0, %v282
  %296 = vrot.lane.b32.xlu0 %v293, 96
  %v297 = vpop.permute.xlu0 %296
  %v299 = vmul.f32 %v294, %v297
  %v300 = vmul.f32 %v282, %v237
  %v301 = vadd.f32 %v299, %v300
  %303 = vrot.lane.b32.xlu0 %v301, 96
  %v304 = vpop.permute.xlu0 %303
  %v305 = vsel %vm105, %v304, 0
  %307 = vmatpush.msra.mxu0 0.0
  %308 = vmatpush.msra.mxu0 0.0
  %309 = vmatpush.msra.mxu0 0.0
  %310 = vmatpush.msra.mxu0 0.0
  %311 = vmatpush.msra.mxu0 0.0
  %312 = vmatpush.msra.mxu0 0.0
  %313 = vmatpush.msra.mxu0 0.0
  %314 = vmatpush.msra.mxu0 0.0
  %315 = vmatpush.msra.mxu0 0.0
  %316 = vmatpush.msra.mxu0 0.0
  %317 = vmatpush.msra.mxu0 0.0
  %318 = vmatpush.msra.mxu0 0.0
  %319 = vmatpush.msra.mxu0 %v174
  %320 = vmatpush.msra.mxu0 %v173
  %321 = vmatpush.msra.mxu0 %v172
  %322 = vmatpush.msra.mxu0 %v171
  %323 = vmatmul.f32.gmra.mxu0 %v305
  %v324 = vpop.f32.mrf.mxu0
  %v325 = vadd.f32 %v175, %v324
  %326 = vdwg.mxu0
  %v327 = vadd.f32 %v154, %v325
  %v328 = vxor.u32 %v327, 2147483648
  %v329 = vmul.f32 %v328, 1.442695
  %v330 = vpow.pop %v329
  %v331 = vadd.f32 %v330, 1.0
  %v332 = vrcp.pop %v331
  %v333 = vmul.f32 %v331, %v332
  %v334 = vsub.f32 1.0, %v333
  %v335 = vmul.f32 %v332, %v334
  %v336 = vadd.f32 %v332, %v335
  %vm337 = vweird.f32 %v331
  %vm338 = vweird.f32 %v332
  %vm339 = vmor %vm337, %vm338
  %v340 = vsel %vm339, %v332, %v336
  %v341 = vand.u32 2147483647, %v331
  %vm342 = vcmp.eq.f32.partialorder %v341, 8.507059e+37
  %v343 = vand.u32 %v331, 2147483648
  %v344 = vor.u32 1.1754944e-38, %v343
  %v345 = vsel %vm342, %v344, %v340
  %v346 = vmul.f32 1.0, %v345
  %348 = vrot.lane.b32.xlu0 %v325, 64
  %v349 = vpop.permute.xlu0 %348
  %v351 = vmul.f32 %v346, %v349
  %353 = vrot.lane.b32.xlu0 %v351, 64
  %v354 = vpop.permute.xlu0 %353
  %v356 = vadd.f32 %v154, %v354
  %v357 = vtanh.pop %v356
  %v358 = vsub.f32 1.0, %v346
  %360 = vrot.lane.b32.xlu0 %v357, 96
  %v361 = vpop.permute.xlu0 %360
  %v363 = vmul.f32 %v358, %v361
  %v364 = vmul.f32 %v346, %v301
  %v365 = vadd.f32 %v363, %v364
  %367 = vrot.lane.b32.xlu0 %v365, 96
  %v368 = vpop.permute.xlu0 %367
  %v369 = vsel %vm105, %v368, 0
  %371 = vmatpush.msra.mxu0 0.0
  %372 = vmatpush.msra.mxu0 0.0
  %373 = vmatpush.msra.mxu0 0.0
  %374 = vmatpush.msra.mxu0 0.0
  %375 = vmatpush.msra.mxu0 0.0
  %376 = vmatpush.msra.mxu0 0.0
  %377 = vmatpush.msra.mxu0 0.0
  %378 = vmatpush.msra.mxu0 0.0
  %379 = vmatpush.msra.mxu0 0.0
  %380 = vmatpush.msra.mxu0 0.0
  %381 = vmatpush.msra.mxu0 0.0
  %382 = vmatpush.msra.mxu0 0.0
  %383 = vmatpush.msra.mxu0 %v174
  %384 = vmatpush.msra.mxu0 %v173
  %385 = vmatpush.msra.mxu0 %v172
  %386 = vmatpush.msra.mxu0 %v171
  %387 = vmatmul.f32.gmra.mxu0 %v369
  %v388 = vpop.f32.mrf.mxu0
  %v389 = vadd.f32 %v175, %v388
  %390 = vdwg.mxu0
  %v391 = vadd.f32 %v157, %v389
  %v392 = vxor.u32 %v391, 2147483648
  %v393 = vmul.f32 %v392, 1.442695
  %v394 = vpow.pop %v393
  %v395 = vadd.f32 %v394, 1.0
  %v396 = vrcp.pop %v395
  %v397 = vmul.f32 %v395, %v396
  %v398 = vsub.f32 1.0, %v397
  %v399 = vmul.f32 %v396, %v398
  %v400 = vadd.f32 %v396, %v399
  %vm401 = vweird.f32 %v395
  %vm402 = vweird.f32 %v396
  %vm403 = vmor %vm401, %vm402
  %v404 = vsel %vm403, %v396, %v400
  %v405 = vand.u32 2147483647, %v395
  %vm406 = vcmp.eq.f32.partialorder %v405, 8.507059e+37
  %v407 = vand.u32 %v395, 2147483648
  %v408 = vor.u32 1.1754944e-38, %v407
  %v409 = vsel %vm406, %v408, %v404
  %v410 = vmul.f32 1.0, %v409
  %412 = vrot.lane.b32.xlu0 %v389, 64
  %v413 = vpop.permute.xlu0 %412
  %v415 = vmul.f32 %v410, %v413
  %417 = vrot.lane.b32.xlu0 %v415, 64
  %v418 = vpop.permute.xlu0 %417
  %v420 = vadd.f32 %v157, %v418
  %v421 = vtanh.pop %v420
  %v422 = vsub.f32 1.0, %v410
  %424 = vrot.lane.b32.xlu0 %v421, 96
  %v425 = vpop.permute.xlu0 %424
  %v427 = vmul.f32 %v422, %v425
  %v428 = vmul.f32 %v410, %v365
  %v429 = vadd.f32 %v427, %v428
  %431 = vrot.lane.b32.xlu0 %v429, 96
  %v432 = vpop.permute.xlu0 %431
  %v433 = vsel %vm105, %v432, 0
  %435 = vmatpush.msra.mxu0 0.0
  %436 = vmatpush.msra.mxu0 0.0
  %437 = vmatpush.msra.mxu0 0.0
  %438 = vmatpush.msra.mxu0 0.0
  %439 = vmatpush.msra.mxu0 0.0
  %440 = vmatpush.msra.mxu0 0.0
  %441 = vmatpush.msra.mxu0 0.0
  %442 = vmatpush.msra.mxu0 0.0
  %443 = vmatpush.msra.mxu0 0.0
  %444 = vmatpush.msra.mxu0 0.0
  %445 = vmatpush.msra.mxu0 0.0
  %446 = vmatpush.msra.mxu0 0.0
  %447 = vmatpush.msra.mxu0 %v174
  %448 = vmatpush.msra.mxu0 %v173
  %449 = vmatpush.msra.mxu0 %v172
  %450 = vmatpush.msra.mxu0 %v171
  %451 = vmatmul.f32.gmra.mxu0 %v433
  %v452 = vpop.f32.mrf.mxu0
  %v453 = vadd.f32 %v175, %v452
  %454 = vdwg.mxu0
  %v455 = vadd.f32 %v160, %v453
  %v456 = vxor.u32 %v455, 2147483648
  %v457 = vmul.f32 %v456, 1.442695
  %v458 = vpow.pop %v457
  %v459 = vadd.f32 %v458, 1.0
  %v460 = vrcp.pop %v459
  %v461 = vmul.f32 %v459, %v460
  %v462 = vsub.f32 1.0, %v461
  %v463 = vmul.f32 %v460, %v462
  %v464 = vadd.f32 %v460, %v463
  %vm465 = vweird.f32 %v459
  %vm466 = vweird.f32 %v460
  %vm467 = vmor %vm465, %vm466
  %v468 = vsel %vm467, %v460, %v464
  %v469 = vand.u32 2147483647, %v459
  %vm470 = vcmp.eq.f32.partialorder %v469, 8.507059e+37
  %v471 = vand.u32 %v459, 2147483648
  %v472 = vor.u32 1.1754944e-38, %v471
  %v473 = vsel %vm470, %v472, %v468
  %v474 = vmul.f32 1.0, %v473
  %476 = vrot.lane.b32.xlu0 %v453, 64
  %v477 = vpop.permute.xlu0 %476
  %v479 = vmul.f32 %v474, %v477
  %481 = vrot.lane.b32.xlu0 %v479, 64
  %v482 = vpop.permute.xlu0 %481
  %v484 = vadd.f32 %v160, %v482
  %v485 = vtanh.pop %v484
  %v486 = vsub.f32 1.0, %v474
  %488 = vrot.lane.b32.xlu0 %v485, 96
  %v489 = vpop.permute.xlu0 %488
  %v491 = vmul.f32 %v486, %v489
  %v492 = vmul.f32 %v474, %v429
  %v493 = vadd.f32 %v491, %v492
  %495 = vrot.lane.b32.xlu0 %v493, 96
  %v496 = vpop.permute.xlu0 %495
  %v497 = vsel %vm105, %v496, 0
  %499 = vmatpush.msra.mxu0 0.0
  %500 = vmatpush.msra.mxu0 0.0
  %501 = vmatpush.msra.mxu0 0.0
  %502 = vmatpush.msra.mxu0 0.0
  %503 = vmatpush.msra.mxu0 0.0
  %504 = vmatpush.msra.mxu0 0.0
  %505 = vmatpush.msra.mxu0 0.0
  %506 = vmatpush.msra.mxu0 0.0
  %507 = vmatpush.msra.mxu0 0.0
  %508 = vmatpush.msra.mxu0 0.0
  %509 = vmatpush.msra.mxu0 0.0
  %510 = vmatpush.msra.mxu0 0.0
  %511 = vmatpush.msra.mxu0 %v174
  %512 = vmatpush.msra.mxu0 %v173
  %513 = vmatpush.msra.mxu0 %v172
  %514 = vmatpush.msra.mxu0 %v171
  %515 = vmatmul.f32.gmra.mxu0 %v497
  %v516 = vpop.f32.mrf.mxu0
  %v517 = vadd.f32 %v175, %v516
  %518 = vdwg.mxu0
  %v519 = vadd.f32 %v163, %v517
  %v520 = vxor.u32 %v519, 2147483648
  %v521 = vmul.f32 %v520, 1.442695
  %v522 = vpow.pop %v521
  %v523 = vadd.f32 %v522, 1.0
  %v524 = vrcp.pop %v523
  %v525 = vmul.f32 %v523, %v524
  %v526 = vsub.f32 1.0, %v525
  %v527 = vmul.f32 %v524, %v526
  %v528 = vadd.f32 %v524, %v527
  %vm529 = vweird.f32 %v523
  %vm530 = vweird.f32 %v524
  %vm531 = vmor %vm529, %vm530
  %v532 = vsel %vm531, %v524, %v528
  %v533 = vand.u32 2147483647, %v523
  %vm534 = vcmp.eq.f32.partialorder %v533, 8.507059e+37
  %v535 = vand.u32 %v523, 2147483648
  %v536 = vor.u32 1.1754944e-38, %v535
  %v537 = vsel %vm534, %v536, %v532
  %v538 = vmul.f32 1.0, %v537
  %540 = vrot.lane.b32.xlu0 %v517, 64
  %v541 = vpop.permute.xlu0 %540
  %v543 = vmul.f32 %v538, %v541
  %545 = vrot.lane.b32.xlu0 %v543, 64
  %v546 = vpop.permute.xlu0 %545
  %v548 = vadd.f32 %v163, %v546
  %v549 = vtanh.pop %v548
  %v550 = vsub.f32 1.0, %v538
  %552 = vrot.lane.b32.xlu0 %v549, 96
  %v553 = vpop.permute.xlu0 %552
  %v555 = vmul.f32 %v550, %v553
  %v556 = vmul.f32 %v538, %v493
  %v557 = vadd.f32 %v555, %v556
  %559 = vrot.lane.b32.xlu0 %v557, 96
  %v560 = vpop.permute.xlu0 %559
  %v561 = vsel %vm105, %v560, 0
  %563 = vmatpush.msra.mxu0 0.0
  %564 = vmatpush.msra.mxu0 0.0
  %565 = vmatpush.msra.mxu0 0.0
  %566 = vmatpush.msra.mxu0 0.0
  %567 = vmatpush.msra.mxu0 0.0
  %568 = vmatpush.msra.mxu0 0.0
  %569 = vmatpush.msra.mxu0 0.0
  %570 = vmatpush.msra.mxu0 0.0
  %571 = vmatpush.msra.mxu0 0.0
  %572 = vmatpush.msra.mxu0 0.0
  %573 = vmatpush.msra.mxu0 0.0
  %574 = vmatpush.msra.mxu0 0.0
  %575 = vmatpush.msra.mxu0 %v174
  %576 = vmatpush.msra.mxu0 %v173
  %577 = vmatpush.msra.mxu0 %v172
  %578 = vmatpush.msra.mxu0 %v171
  %579 = vmatmul.f32.gmra.mxu0 %v561
  %v580 = vpop.f32.mrf.mxu0
  %v581 = vadd.f32 %v175, %v580
  %582 = vdwg.mxu0
  %v583 = vadd.f32 %v166, %v581
  %v584 = vxor.u32 %v583, 2147483648
  %v585 = vmul.f32 %v584, 1.442695
  %v586 = vpow.pop %v585
  %v587 = vadd.f32 %v586, 1.0
  %v588 = vrcp.pop %v587
  %v589 = vmul.f32 %v587, %v588
  %v590 = vsub.f32 1.0, %v589
  %v591 = vmul.f32 %v588, %v590
  %v592 = vadd.f32 %v588, %v591
  %vm593 = vweird.f32 %v587
  %vm594 = vweird.f32 %v588
  %vm595 = vmor %vm593, %vm594
  %v596 = vsel %vm595, %v588, %v592
  %v597 = vand.u32 2147483647, %v587
  %vm598 = vcmp.eq.f32.partialorder %v597, 8.507059e+37
  %v599 = vand.u32 %v587, 2147483648
  %v600 = vor.u32 1.1754944e-38, %v599
  %v601 = vsel %vm598, %v600, %v596
  %v602 = vmul.f32 1.0, %v601
  %604 = vrot.lane.b32.xlu0 %v581, 64
  %v605 = vpop.permute.xlu0 %604
  %v607 = vmul.f32 %v602, %v605
  %609 = vrot.lane.b32.xlu0 %v607, 64
  %v610 = vpop.permute.xlu0 %609
  %v612 = vadd.f32 %v166, %v610
  %v613 = vtanh.pop %v612
  %v614 = vsub.f32 1.0, %v602
  %616 = vrot.lane.b32.xlu0 %v613, 96
  %v617 = vpop.permute.xlu0 %616
  %v619 = vmul.f32 %v614, %v617
  %v620 = vmul.f32 %v602, %v557
  %v621 = vadd.f32 %v619, %v620
  %623 = vrot.lane.b32.xlu0 %v621, 96
  %v624 = vpop.permute.xlu0 %623
  %v625 = vsel %vm105, %v624, 0
  %627 = vmatpush.msra.mxu0 0.0
  %628 = vmatpush.msra.mxu0 0.0
  %629 = vmatpush.msra.mxu0 0.0
  %630 = vmatpush.msra.mxu0 0.0
  %631 = vmatpush.msra.mxu0 0.0
  %632 = vmatpush.msra.mxu0 0.0
  %633 = vmatpush.msra.mxu0 0.0
  %634 = vmatpush.msra.mxu0 0.0
  %635 = vmatpush.msra.mxu0 0.0
  %636 = vmatpush.msra.mxu0 0.0
  %637 = vmatpush.msra.mxu0 0.0
  %638 = vmatpush.msra.mxu0 0.0
  %639 = vmatpush.msra.mxu0 %v174
  %640 = vmatpush.msra.mxu0 %v173
  %641 = vmatpush.msra.mxu0 %v172
  %642 = vmatpush.msra.mxu0 %v171
  %643 = vmatmul.f32.gmra.mxu0 %v625
  %v644 = vpop.f32.mrf.mxu0
  %v645 = vadd.f32 %v175, %v644
  %646 = vdwg.mxu0
  %v647 = vadd.f32 %v169, %v645
  %v648 = vxor.u32 %v647, 2147483648
  %v649 = vmul.f32 %v648, 1.442695
  %v650 = vpow.pop %v649
  %v651 = vadd.f32 %v650, 1.0
  %v652 = vrcp.pop %v651
  %v653 = vmul.f32 %v651, %v652
  %v654 = vsub.f32 1.0, %v653
  %v655 = vmul.f32 %v652, %v654
  %v656 = vadd.f32 %v652, %v655
  %vm657 = vweird.f32 %v651
  %vm658 = vweird.f32 %v652
  %vm659 = vmor %vm657, %vm658
  %v660 = vsel %vm659, %v652, %v656
  %v661 = vand.u32 2147483647, %v651
  %vm662 = vcmp.eq.f32.partialorder %v661, 8.507059e+37
  %v663 = vand.u32 %v651, 2147483648
  %v664 = vor.u32 1.1754944e-38, %v663
  %v665 = vsel %vm662, %v664, %v660
  %v666 = vmul.f32 1.0, %v665
  %668 = vrot.lane.b32.xlu0 %v645, 64
  %v669 = vpop.permute.xlu0 %668
  %v671 = vmul.f32 %v666, %v669
  %673 = vrot.lane.b32.xlu0 %v671, 64
  %v674 = vpop.permute.xlu0 %673
  %v676 = vadd.f32 %v169, %v674
  %v677 = vtanh.pop %v676
  %v678 = vsub.f32 1.0, %v666
  %680 = vrot.lane.b32.xlu0 %v677, 96
  %v681 = vpop.permute.xlu0 %680
  %v683 = vmul.f32 %v678, %v681
  %v684 = vmul.f32 %v666, %v621
  %v685 = vadd.f32 %v683, %v684
  %v686 = vld [vmem:[%s1 + $0x40] sm:$0xf]
  %v687 = vld [vmem:[%s0 + $0xd0] sm:$0xff]
  %v688 = vld [vmem:[%s0 + $0xe0] sm:$0xff]
  %690 = vrot.lane.b32.xlu0 %v685, 96
  %v691 = vpop.permute.xlu0 %690
  %vm692 = vcmask 130048
  %v693 = vsel %vm692, %v691, 0
  %695 = vmatpush.msra.mxu0 0.0
  %696 = vmatpush.msra.mxu0 0.0
  %697 = vmatpush.msra.mxu0 0.0
  %698 = vmatpush.msra.mxu0 0.0
  %699 = vmatpush.msra.mxu0 0.0
  %700 = vmatpush.msra.mxu0 0.0
  %701 = vmatpush.msra.mxu0 0.0
  %702 = vmatpush.msra.mxu0 0.0
  %703 = vmatpush.msra.mxu0 0.0
  %704 = vmatpush.msra.mxu0 0.0
  %705 = vmatpush.msra.mxu0 0.0
  %706 = vmatpush.msra.mxu0 0.0
  %707 = vmatpush.msra.mxu0 0.0
  %708 = vmatpush.msra.mxu0 0.0
  %709 = vmatpush.msra.mxu0 %v688
  %710 = vmatpush.msra.mxu0 %v687
  %711 = vmatmul.f32.gmra.mxu0 %v693
  %v712 = vpop.f32.mrf.mxu0
  %v713 = vadd.f32 0.0, %v712
  %714 = vdwg.mxu0
  %v715 = vld [vmem:[%s0 + $0xf0] ss:$0 sm:$0xff]
  %vm716 = vcmask 31744
  %v718 = vsel %vm716, %v686, 0
  %v721 = vsel %vm47, %v713, 0
  %723 = vmatpush.msra.mxu0 0.0
  %724 = vmatpush.msra.mxu0 0.0
  %725 = vmatpush.msra.mxu0 0.0
  %726 = vmatpush.msra.mxu0 0.0
  %727 = vmatpush.msra.mxu0 0.0
  %728 = vmatpush.msra.mxu0 0.0
  %729 = vmatpush.msra.mxu0 0.0
  %730 = vmatpush.msra.mxu0 0.0
  %731 = vmatpush.msra.mxu0 0.0
  %732 = vmatpush.msra.mxu0 0.0
  %733 = vmatpush.msra.mxu0 0.0
  %734 = vmatpush.msra.mxu0 0.0
  %735 = vmatpush.msra.mxu0 0.0
  %736 = vmatpush.msra.mxu0 0.0
  %737 = vmatpush.msra.mxu0 0.0
  %738 = vmatpush.msra.mxu0 %v721
  %739 = vmatmul.f32.gmra.mxu0 %v718
  %v740 = vpop.f32.mrf.mxu0
  %v741 = vadd.f32 %v715, %v740
  %742 = vdwg.mxu0
  %v743 = vmax.f32 %v741, 0.0
  %v744 = vld [vmem:[%s0 + $0x100] sm:$0xff]
  %v745 = vld [vmem:[%s0 + $0x110] sm:$0xff]
  %v747 = vsel %vm692, %v743, 0
  %749 = vmatpush.msra.mxu0 0.0
  %750 = vmatpush.msra.mxu0 0.0
  %751 = vmatpush.msra.mxu0 0.0
  %752 = vmatpush.msra.mxu0 0.0
  %753 = vmatpush.msra.mxu0 0.0
  %754 = vmatpush.msra.mxu0 0.0
  %755 = vmatpush.msra.mxu0 0.0
  %756 = vmatpush.msra.mxu0 0.0
  %757 = vmatpush.msra.mxu0 0.0
  %758 = vmatpush.msra.mxu0 0.0
  %759 = vmatpush.msra.mxu0 0.0
  %760 = vmatpush.msra.mxu0 0.0
  %761 = vmatpush.msra.mxu0 0.0
  %762 = vmatpush.msra.mxu0 0.0
  %763 = vmatpush.msra.mxu0 %v745
  %764 = vmatpush.msra.mxu0 %v744
  %765 = vmatmul.f32.gmra.mxu0 %v747
  %v766 = vpop.f32.mrf.mxu0
  %v767 = vadd.f32 0.0, %v766
  %768 = vdwg.mxu0
  %v769 = vld [vmem:[%s0 + $0x120] ss:$0 sm:$0xff]
  %v771 = vsel %vm47, %v767, 0
  %773 = vmatpush.msra.mxu0 0.0
  %774 = vmatpush.msra.mxu0 0.0
  %775 = vmatpush.msra.mxu0 0.0
  %776 = vmatpush.msra.mxu0 0.0
  %777 = vmatpush.msra.mxu0 0.0
  %778 = vmatpush.msra.mxu0 0.0
  %779 = vmatpush.msra.mxu0 0.0
  %780 = vmatpush.msra.mxu0 0.0
  %781 = vmatpush.msra.mxu0 0.0
  %782 = vmatpush.msra.mxu0 0.0
  %783 = vmatpush.msra.mxu0 0.0
  %784 = vmatpush.msra.mxu0 0.0
  %785 = vmatpush.msra.mxu0 0.0
  %786 = vmatpush.msra.mxu0 0.0
  %787 = vmatpush.msra.mxu0 0.0
  %788 = vmatpush.msra.mxu0 %v771
  %789 = vmatmul.f32.gmra.mxu0 %v718
  %v790 = vpop.f32.mrf.mxu0
  %v791 = vadd.f32 %v769, %v790
  %792 = vdwg.mxu0
  %v793 = vld [vmem:[%s0 + $0x130] sm:$0xff]
  %v794 = vld [vmem:[%s0 + $0x138] sm:$0xff]
  %v795 = vld [vmem:[%s0 + $0x140] sm:$0xff]
  %v796 = vld [vmem:[%s0 + $0x148] sm:$0xff]
  %v797 = vld [vmem:[%s0 + $0x150] sm:$0xff]
  %v798 = vld [vmem:[%s0 + $0x158] sm:$0xff]
  %v799 = vld [vmem:[%s0 + $0x160] sm:$0xff]
  %v800 = vld [vmem:[%s0 + $0x168] sm:$0xff]
  %v801 = vld [vmem:[%s0 + $0x170] sm:$0xff]
  %v802 = vld [vmem:[%s0 + $0x178] sm:$0xff]
  %v803 = vld [vmem:[%s0 + $0x180] sm:$0xff]
  %v804 = vld [vmem:[%s0 + $0x188] sm:$0xff]
  %v805 = vld [vmem:[%s0 + $0x190] sm:$0xff]
  %v806 = vld [vmem:[%s0 + $0x198] sm:$0xff]
  %v807 = vld [vmem:[%s0 + $0x1a0] sm:$0xff]
  %v808 = vld [vmem:[%s0 + $0x1a8] sm:$0xff]
  %v809 = vld [vmem:[%s0 + $0x1b0] sm:$0xff]
  %v810 = vld [vmem:[%s0 + $0x1b8] sm:$0xff]
  %v811 = vld [vmem:[%s0 + $0x1c0] sm:$0xff]
  %v812 = vld [vmem:[%s0 + $0x1c8] sm:$0xff]
  %v813 = vld [vmem:[%s0 + $0x1d0] sm:$0xff]
  %v814 = vld [vmem:[%s0 + $0x1d8] sm:$0xff]
  %v815 = vld [vmem:[%s0 + $0x1e0] sm:$0xff]
  %v816 = vld [vmem:[%s0 + $0x1e8] sm:$0xff]
  %s817 = scalar_lea.vmem %s0, 496
  %v818 = vld [vmem:[%s817] ss:$8 sm:$0x3]
  %s819 = scalar_lea.vmem %s0, 512
  %v820 = vld [vmem:[%s819] ss:$8 sm:$0x3]
  %v821 = vrot.slane %v685, 4
  %822 = vrot.lane.b32.xlu0 %v821, 112
  %v823 = vpop.permute.xlu0 %822
  %825 = vrot.lane.b32.xlu0 %v685, 112
  %v826 = vpop.permute.xlu0 %825
  %v828 = vsel %vm692, %v791, %v823
  %v829 = vsel %vm105, %v828, %v826
  %v831 = vperm.slane %v818, 0
  %v832 = vperm.slane %v818, 1
  %vm835 = vcmask 392192
  %v837 = vsel %vm835, %v829, 0
  %839 = vmatpush.msra.mxu0 0.0
  %840 = vmatpush.msra.mxu0 0.0
  %841 = vmatpush.msra.mxu0 0.0
  %842 = vmatpush.msra.mxu0 0.0
  %843 = vmatpush.msra.mxu0 0.0
  %844 = vmatpush.msra.mxu0 0.0
  %845 = vmatpush.msra.mxu0 0.0
  %846 = vmatpush.msra.mxu0 0.0
  %847 = vmatpush.msra.mxu0 0.0
  %848 = vmatpush.msra.mxu0 0.0
  %849 = vmatpush.msra.mxu0 %v803
  %850 = vmatpush.msra.mxu0 %v801
  %851 = vmatpush.msra.mxu0 %v799
  %852 = vmatpush.msra.mxu0 %v797
  %853 = vmatpush.msra.mxu0 %v795
  %854 = vmatpush.msra.mxu0 %v793
  %855 = vmatmul.f32.gmra.mxu0 %v837
  %v856 = vpop.f32.mrf.mxu0
  %v857 = vadd.f32 %v831, %v856
  %858 = vdwg.mxu0
  %859 = vmatpush.msra.mxu0 0.0
  %860 = vmatpush.msra.mxu0 0.0
  %861 = vmatpush.msra.mxu0 0.0
  %862 = vmatpush.msra.mxu0 0.0
  %863 = vmatpush.msra.mxu0 0.0
  %864 = vmatpush.msra.mxu0 0.0
  %865 = vmatpush.msra.mxu0 0.0
  %866 = vmatpush.msra.mxu0 0.0
  %867 = vmatpush.msra.mxu0 0.0
  %868 = vmatpush.msra.mxu0 0.0
  %869 = vmatpush.msra.mxu0 %v804
  %870 = vmatpush.msra.mxu0 %v802
  %871 = vmatpush.msra.mxu0 %v800
  %872 = vmatpush.msra.mxu0 %v798
  %873 = vmatpush.msra.mxu0 %v796
  %874 = vmatpush.msra.mxu0 %v794
  %875 = vmatmul.f32.gmra.mxu0 %v837
  %v876 = vpop.f32.mrf.mxu0
  %v877 = vadd.f32 %v832, %v876
  %878 = vdwg.mxu0
  %v880 = vperm.slane %v820, 0
  %v881 = vperm.slane %v820, 1
  %v884 = vsel %vm835, 0.0, 0
  %886 = vmatpush.msra.mxu0 0.0
  %887 = vmatpush.msra.mxu0 0.0
  %888 = vmatpush.msra.mxu0 0.0
  %889 = vmatpush.msra.mxu0 0.0
  %890 = vmatpush.msra.mxu0 0.0
  %891 = vmatpush.msra.mxu0 0.0
  %892 = vmatpush.msra.mxu0 0.0
  %893 = vmatpush.msra.mxu0 0.0
  %894 = vmatpush.msra.mxu0 0.0
  %895 = vmatpush.msra.mxu0 0.0
  %896 = vmatpush.msra.mxu0 %v815
  %897 = vmatpush.msra.mxu0 %v813
  %898 = vmatpush.msra.mxu0 %v811
  %899 = vmatpush.msra.mxu0 %v809
  %900 = vmatpush.msra.mxu0 %v807
  %901 = vmatpush.msra.mxu0 %v805
  %902 = vmatmul.f32.gmra.mxu0 %v884
  %v903 = vpop.f32.mrf.mxu0
  %v904 = vadd.f32 %v880, %v903
  %905 = vdwg.mxu0
  %906 = vmatpush.msra.mxu0 0.0
  %907 = vmatpush.msra.mxu0 0.0
  %908 = vmatpush.msra.mxu0 0.0
  %909 = vmatpush.msra.mxu0 0.0
  %910 = vmatpush.msra.mxu0 0.0
  %911 = vmatpush.msra.mxu0 0.0
  %912 = vmatpush.msra.mxu0 0.0
  %913 = vmatpush.msra.mxu0 0.0
  %914 = vmatpush.msra.mxu0 0.0
  %915 = vmatpush.msra.mxu0 0.0
  %916 = vmatpush.msra.mxu0 %v816
  %917 = vmatpush.msra.mxu0 %v814
  %918 = vmatpush.msra.mxu0 %v812
  %919 = vmatpush.msra.mxu0 %v810
  %920 = vmatpush.msra.mxu0 %v808
  %921 = vmatpush.msra.mxu0 %v806
  %922 = vmatmul.f32.gmra.mxu0 %v884
  %v923 = vpop.f32.mrf.mxu0
  %v924 = vadd.f32 %v881, %v923
  %925 = vdwg.mxu0
  %v926 = vadd.f32 %v857, %v904
  %v927 = vxor.u32 %v926, 2147483648
  %v928 = vmul.f32 %v927, 1.442695
  %v929 = vpow.pop %v928
  %v930 = vadd.f32 %v929, 1.0
  %v931 = vrcp.pop %v930
  %v932 = vmul.f32 %v930, %v931
  %v933 = vsub.f32 1.0, %v932
  %v934 = vmul.f32 %v931, %v933
  %v935 = vadd.f32 %v931, %v934
  %vm936 = vweird.f32 %v930
  %vm937 = vweird.f32 %v931
  %vm938 = vmor %vm936, %vm937
  %v939 = vsel %vm938, %v931, %v935
  %v940 = vand.u32 2147483647, %v930
  %vm941 = vcmp.eq.f32.partialorder %v940, 8.507059e+37
  %v942 = vand.u32 %v930, 2147483648
  %v943 = vor.u32 1.1754944e-38, %v942
  %v944 = vsel %vm941, %v943, %v939
  %v945 = vmul.f32 1.0, %v944
  %948 = vrot.lane.b32.xlu0 %v904, 32
  %v949 = vpop.permute.xlu0 %948
  %950 = vrot.lane.b32.xlu0 %v924, 32
  %v951 = vpop.permute.xlu0 %950
  %v952 = vsel %vm105, %v949, %v951
  %v954 = vmul.f32 %v945, %v952
  %956 = vrot.lane.b32.xlu0 %v954, 96
  %v957 = vpop.permute.xlu0 %956
  %v959 = vadd.f32 %v857, %v957
  %v960 = vadd.f32 %v877, %v957
  %v961 = vtanh.pop %v959
  %v962 = vtanh.pop %v960
  %v963 = vsub.f32 1.0, %v945
  %966 = vrot.lane.b32.xlu0 %v961, 80
  %v967 = vpop.permute.xlu0 %966
  %968 = vrot.lane.b32.xlu0 %v962, 80
  %v969 = vpop.permute.xlu0 %968
  %vm970 = vcmask 654336
  %v971 = vsel %vm970, %v967, %v969
  %v973 = vmul.f32 %v963, %v971
  %v974 = vmul.f32 %v945, 0.0
  %v975 = vadd.f32 %v973, %v974
  %977 = vrot.lane.b32.xlu0 %v975, 80
  %v978 = vpop.permute.xlu0 %977
  %v979 = vsel %vm835, %v978, 0
  %981 = vmatpush.msra.mxu0 0.0
  %982 = vmatpush.msra.mxu0 0.0
  %983 = vmatpush.msra.mxu0 0.0
  %984 = vmatpush.msra.mxu0 0.0
  %985 = vmatpush.msra.mxu0 0.0
  %986 = vmatpush.msra.mxu0 0.0
  %987 = vmatpush.msra.mxu0 0.0
  %988 = vmatpush.msra.mxu0 0.0
  %989 = vmatpush.msra.mxu0 0.0
  %990 = vmatpush.msra.mxu0 0.0
  %991 = vmatpush.msra.mxu0 %v815
  %992 = vmatpush.msra.mxu0 %v813
  %993 = vmatpush.msra.mxu0 %v811
  %994 = vmatpush.msra.mxu0 %v809
  %995 = vmatpush.msra.mxu0 %v807
  %996 = vmatpush.msra.mxu0 %v805
  %997 = vmatmul.f32.gmra.mxu0 %v979
  %v998 = vpop.f32.mrf.mxu0
  %v999 = vadd.f32 %v880, %v998
  %1000 = vdwg.mxu0
  %1001 = vmatpush.msra.mxu0 0.0
  %1002 = vmatpush.msra.mxu0 0.0
  %1003 = vmatpush.msra.mxu0 0.0
  %1004 = vmatpush.msra.mxu0 0.0
  %1005 = vmatpush.msra.mxu0 0.0
  %1006 = vmatpush.msra.mxu0 0.0
  %1007 = vmatpush.msra.mxu0 0.0
  %1008 = vmatpush.msra.mxu0 0.0
  %1009 = vmatpush.msra.mxu0 0.0
  %1010 = vmatpush.msra.mxu0 0.0
  %1011 = vmatpush.msra.mxu0 %v816
  %1012 = vmatpush.msra.mxu0 %v814
  %1013 = vmatpush.msra.mxu0 %v812
  %1014 = vmatpush.msra.mxu0 %v810
  %1015 = vmatpush.msra.mxu0 %v808
  %1016 = vmatpush.msra.mxu0 %v806
  %1017 = vmatmul.f32.gmra.mxu0 %v979
  %v1018 = vpop.f32.mrf.mxu0
  %v1019 = vadd.f32 %v881, %v1018
  %1020 = vdwg.mxu0
  %v1021 = vadd.f32 %v818, %v999
  %v1022 = vxor.u32 %v1021, 2147483648
  %v1023 = vmul.f32 %v1022, 1.442695
  %v1024 = vpow.pop %v1023
  %v1025 = vadd.f32 %v1024, 1.0
  %v1026 = vrcp.pop %v1025
  %v1027 = vmul.f32 %v1025, %v1026
  %v1028 = vsub.f32 1.0, %v1027
  %v1029 = vmul.f32 %v1026, %v1028
  %v1030 = vadd.f32 %v1026, %v1029
  %vm1031 = vweird.f32 %v1025
  %vm1032 = vweird.f32 %v1026
  %vm1033 = vmor %vm1031, %vm1032
  %v1034 = vsel %vm1033, %v1026, %v1030
  %v1035 = vand.u32 2147483647, %v1025
  %vm1036 = vcmp.eq.f32.partialorder %v1035, 8.507059e+37
  %v1037 = vand.u32 %v1025, 2147483648
  %v1038 = vor.u32 1.1754944e-38, %v1037
  %v1039 = vsel %vm1036, %v1038, %v1034
  %v1040 = vmul.f32 1.0, %v1039
  %v1043 = vrot.slane %v1019, 7
  %vm1044 = vcmask 1040384
  %v1045 = vsel %vm1044, %v999, %v1043
  %1046 = vrot.lane.b32.xlu0 %v1045, 32
  %v1047 = vpop.permute.xlu0 %1046
  %v1048 = vrot.slane %v1047, 1
  %v1049 = vsel %vm105, %v1047, %v1048
  %v1051 = vmul.f32 %v1040, %v1049
  %1053 = vrot.lane.b32.xlu0 %v1051, 96
  %v1054 = vpop.permute.xlu0 %1053
  %v1055 = vrot.slane %v1054, 7
  %vm1056 = vcmask 785408
  %v1057 = vsel %vm1056, %v1055, %v1054
  %v1059 = vadd.f32 %v818, %v1057
  %v1060 = vtanh.pop %v1059
  %v1061 = vsub.f32 1.0, %v1040
  %1063 = vrot.lane.b32.xlu0 %v1060, 80
  %v1064 = vpop.permute.xlu0 %1063
  %v1065 = vrot.slane %v1064, 1
  %v1066 = vsel %vm970, %v1064, %v1065
  %v1068 = vmul.f32 %v1061, %v1066
  %v1069 = vmul.f32 %v1040, %v975
  %v1070 = vadd.f32 %v1068, %v1069
  %v1072 = vperm.slane %v1070, 0
  %1073 = vrot.lane.b32.xlu0 %v1072, 80
  %v1074 = vpop.permute.xlu0 %1073
  %v1075 = vsel %vm835, %v1074, 0
  %1077 = vmatpush.msra.mxu0 0.0
  %1078 = vmatpush.msra.mxu0 0.0
  %1079 = vmatpush.msra.mxu0 0.0
  %1080 = vmatpush.msra.mxu0 0.0
  %1081 = vmatpush.msra.mxu0 0.0
  %1082 = vmatpush.msra.mxu0 0.0
  %1083 = vmatpush.msra.mxu0 0.0
  %1084 = vmatpush.msra.mxu0 0.0
  %1085 = vmatpush.msra.mxu0 0.0
  %1086 = vmatpush.msra.mxu0 0.0
  %1087 = vmatpush.msra.mxu0 %v815
  %1088 = vmatpush.msra.mxu0 %v813
  %1089 = vmatpush.msra.mxu0 %v811
  %1090 = vmatpush.msra.mxu0 %v809
  %1091 = vmatpush.msra.mxu0 %v807
  %1092 = vmatpush.msra.mxu0 %v805
  %1093 = vmatmul.f32.gmra.mxu0 %v1075
  %v1094 = vpop.f32.mrf.mxu0
  %v1095 = vadd.f32 %v880, %v1094
  %1096 = vdwg.mxu0
  %1097 = vmatpush.msra.mxu0 0.0
  %1098 = vmatpush.msra.mxu0 0.0
  %1099 = vmatpush.msra.mxu0 0.0
  %1100 = vmatpush.msra.mxu0 0.0
  %1101 = vmatpush.msra.mxu0 0.0
  %1102 = vmatpush.msra.mxu0 0.0
  %1103 = vmatpush.msra.mxu0 0.0
  %1104 = vmatpush.msra.mxu0 0.0
  %1105 = vmatpush.msra.mxu0 0.0
  %1106 = vmatpush.msra.mxu0 0.0
  %1107 = vmatpush.msra.mxu0 %v816
  %1108 = vmatpush.msra.mxu0 %v814
  %1109 = vmatpush.msra.mxu0 %v812
  %1110 = vmatpush.msra.mxu0 %v810
  %1111 = vmatpush.msra.mxu0 %v808
  %1112 = vmatpush.msra.mxu0 %v806
  %1113 = vmatmul.f32.gmra.mxu0 %v1075
  %v1114 = vpop.f32.mrf.mxu0
  %v1115 = vadd.f32 %v881, %v1114
  %1116 = vdwg.mxu0
  %v1117 = vadd.f32 %v818, %v1095
  %v1118 = vxor.u32 %v1117, 2147483648
  %v1119 = vmul.f32 %v1118, 1.442695
  %v1120 = vpow.pop %v1119
  %v1121 = vadd.f32 %v1120, 1.0
  %v1122 = vrcp.pop %v1121
  %v1123 = vmul.f32 %v1121, %v1122
  %v1124 = vsub.f32 1.0, %v1123
  %v1125 = vmul.f32 %v1122, %v1124
  %v1126 = vadd.f32 %v1122, %v1125
  %vm1127 = vweird.f32 %v1121
  %vm1128 = vweird.f32 %v1122
  %vm1129 = vmor %vm1127, %vm1128
  %v1130 = vsel %vm1129, %v1122, %v1126
  %v1131 = vand.u32 2147483647, %v1121
  %vm1132 = vcmp.eq.f32.partialorder %v1131, 8.507059e+37
  %v1133 = vand.u32 %v1121, 2147483648
  %v1134 = vor.u32 1.1754944e-38, %v1133
  %v1135 = vsel %vm1132, %v1134, %v1130
  %v1136 = vmul.f32 1.0, %v1135
  %v1139 = vrot.slane %v1115, 7
  %v1140 = vsel %vm1044, %v1095, %v1139
  %1141 = vrot.lane.b32.xlu0 %v1140, 32
  %v1142 = vpop.permute.xlu0 %1141
  %v1143 = vrot.slane %v1142, 1
  %v1144 = vsel %vm105, %v1142, %v1143
  %v1146 = vmul.f32 %v1136, %v1144
  %1148 = vrot.lane.b32.xlu0 %v1146, 96
  %v1149 = vpop.permute.xlu0 %1148
  %v1150 = vrot.slane %v1149, 7
  %v1151 = vsel %vm1056, %v1150, %v1149
  %v1153 = vadd.f32 %v818, %v1151
  %v1154 = vtanh.pop %v1153
  %v1155 = vsub.f32 1.0, %v1136
  %1157 = vrot.lane.b32.xlu0 %v1154, 80
  %v1158 = vpop.permute.xlu0 %1157
  %v1159 = vrot.slane %v1158, 1
  %v1160 = vsel %vm970, %v1158, %v1159
  %v1162 = vmul.f32 %v1155, %v1160
  %v1163 = vmul.f32 %v1136, %v1070
  %v1164 = vadd.f32 %v1162, %v1163
  %v1166 = vperm.slane %v1164, 0
  %1167 = vrot.lane.b32.xlu0 %v1166, 80
  %v1168 = vpop.permute.xlu0 %1167
  %v1169 = vsel %vm835, %v1168, 0
  %1171 = vmatpush.msra.mxu0 0.0
  %1172 = vmatpush.msra.mxu0 0.0
  %1173 = vmatpush.msra.mxu0 0.0
  %1174 = vmatpush.msra.mxu0 0.0
  %1175 = vmatpush.msra.mxu0 0.0
  %1176 = vmatpush.msra.mxu0 0.0
  %1177 = vmatpush.msra.mxu0 0.0
  %1178 = vmatpush.msra.mxu0 0.0
  %1179 = vmatpush.msra.mxu0 0.0
  %1180 = vmatpush.msra.mxu0 0.0
  %1181 = vmatpush.msra.mxu0 %v815
  %1182 = vmatpush.msra.mxu0 %v813
  %1183 = vmatpush.msra.mxu0 %v811
  %1184 = vmatpush.msra.mxu0 %v809
  %1185 = vmatpush.msra.mxu0 %v807
  %1186 = vmatpush.msra.mxu0 %v805
  %1187 = vmatmul.f32.gmra.mxu0 %v1169
  %v1188 = vpop.f32.mrf.mxu0
  %v1189 = vadd.f32 %v880, %v1188
  %1190 = vdwg.mxu0
  %1191 = vmatpush.msra.mxu0 0.0
  %1192 = vmatpush.msra.mxu0 0.0
  %1193 = vmatpush.msra.mxu0 0.0
  %1194 = vmatpush.msra.mxu0 0.0
  %1195 = vmatpush.msra.mxu0 0.0
  %1196 = vmatpush.msra.mxu0 0.0
  %1197 = vmatpush.msra.mxu0 0.0
  %1198 = vmatpush.msra.mxu0 0.0
  %1199 = vmatpush.msra.mxu0 0.0
  %1200 = vmatpush.msra.mxu0 0.0
  %1201 = vmatpush.msra.mxu0 %v816
  %1202 = vmatpush.msra.mxu0 %v814
  %1203 = vmatpush.msra.mxu0 %v812
  %1204 = vmatpush.msra.mxu0 %v810
  %1205 = vmatpush.msra.mxu0 %v808
  %1206 = vmatpush.msra.mxu0 %v806
  %1207 = vmatmul.f32.gmra.mxu0 %v1169
  %v1208 = vpop.f32.mrf.mxu0
  %v1209 = vadd.f32 %v881, %v1208
  %1210 = vdwg.mxu0
  %v1211 = vadd.f32 %v818, %v1189
  %v1212 = vxor.u32 %v1211, 2147483648
  %v1213 = vmul.f32 %v1212, 1.442695
  %v1214 = vpow.pop %v1213
  %v1215 = vadd.f32 %v1214, 1.0
  %v1216 = vrcp.pop %v1215
  %v1217 = vmul.f32 %v1215, %v1216
  %v1218 = vsub.f32 1.0, %v1217
  %v1219 = vmul.f32 %v1216, %v1218
  %v1220 = vadd.f32 %v1216, %v1219
  %vm1221 = vweird.f32 %v1215
  %vm1222 = vweird.f32 %v1216
  %vm1223 = vmor %vm1221, %vm1222
  %v1224 = vsel %vm1223, %v1216, %v1220
  %v1225 = vand.u32 2147483647, %v1215
  %vm1226 = vcmp.eq.f32.partialorder %v1225, 8.507059e+37
  %v1227 = vand.u32 %v1215, 2147483648
  %v1228 = vor.u32 1.1754944e-38, %v1227
  %v1229 = vsel %vm1226, %v1228, %v1224
  %v1230 = vmul.f32 1.0, %v1229
  %v1233 = vrot.slane %v1209, 7
  %v1234 = vsel %vm1044, %v1189, %v1233
  %1235 = vrot.lane.b32.xlu0 %v1234, 32
  %v1236 = vpop.permute.xlu0 %1235
  %v1237 = vrot.slane %v1236, 1
  %v1238 = vsel %vm105, %v1236, %v1237
  %v1240 = vmul.f32 %v1230, %v1238
  %1242 = vrot.lane.b32.xlu0 %v1240, 96
  %v1243 = vpop.permute.xlu0 %1242
  %v1244 = vrot.slane %v1243, 7
  %v1245 = vsel %vm1056, %v1244, %v1243
  %v1247 = vadd.f32 %v818, %v1245
  %v1248 = vtanh.pop %v1247
  %v1249 = vsub.f32 1.0, %v1230
  %1251 = vrot.lane.b32.xlu0 %v1248, 80
  %v1252 = vpop.permute.xlu0 %1251
  %v1253 = vrot.slane %v1252, 1
  %v1254 = vsel %vm970, %v1252, %v1253
  %v1256 = vmul.f32 %v1249, %v1254
  %v1257 = vmul.f32 %v1230, %v1164
  %v1258 = vadd.f32 %v1256, %v1257
  %v1260 = vperm.slane %v1258, 0
  %1261 = vrot.lane.b32.xlu0 %v1260, 80
  %v1262 = vpop.permute.xlu0 %1261
  %v1263 = vsel %vm835, %v1262, 0
  %1265 = vmatpush.msra.mxu0 0.0
  %1266 = vmatpush.msra.mxu0 0.0
  %1267 = vmatpush.msra.mxu0 0.0
  %1268 = vmatpush.msra.mxu0 0.0
  %1269 = vmatpush.msra.mxu0 0.0
  %1270 = vmatpush.msra.mxu0 0.0
  %1271 = vmatpush.msra.mxu0 0.0
  %1272 = vmatpush.msra.mxu0 0.0
  %1273 = vmatpush.msra.mxu0 0.0
  %1274 = vmatpush.msra.mxu0 0.0
  %1275 = vmatpush.msra.mxu0 %v815
  %1276 = vmatpush.msra.mxu0 %v813
  %1277 = vmatpush.msra.mxu0 %v811
  %1278 = vmatpush.msra.mxu0 %v809
  %1279 = vmatpush.msra.mxu0 %v807
  %1280 = vmatpush.msra.mxu0 %v805
  %1281 = vmatmul.f32.gmra.mxu0 %v1263
  %v1282 = vpop.f32.mrf.mxu0
  %v1283 = vadd.f32 %v880, %v1282
  %1284 = vdwg.mxu0
  %1285 = vmatpush.msra.mxu0 0.0
  %1286 = vmatpush.msra.mxu0 0.0
  %1287 = vmatpush.msra.mxu0 0.0
  %1288 = vmatpush.msra.mxu0 0.0
  %1289 = vmatpush.msra.mxu0 0.0
  %1290 = vmatpush.msra.mxu0 0.0
  %1291 = vmatpush.msra.mxu0 0.0
  %1292 = vmatpush.msra.mxu0 0.0
  %1293 = vmatpush.msra.mxu0 0.0
  %1294 = vmatpush.msra.mxu0 0.0
  %1295 = vmatpush.msra.mxu0 %v816
  %1296 = vmatpush.msra.mxu0 %v814
  %1297 = vmatpush.msra.mxu0 %v812
  %1298 = vmatpush.msra.mxu0 %v810
  %1299 = vmatpush.msra.mxu0 %v808
  %1300 = vmatpush.msra.mxu0 %v806
  %1301 = vmatmul.f32.gmra.mxu0 %v1263
  %v1302 = vpop.f32.mrf.mxu0
  %v1303 = vadd.f32 %v881, %v1302
  %1304 = vdwg.mxu0
  %v1305 = vadd.f32 %v818, %v1283
  %v1306 = vxor.u32 %v1305, 2147483648
  %v1307 = vmul.f32 %v1306, 1.442695
  %v1308 = vpow.pop %v1307
  %v1309 = vadd.f32 %v1308, 1.0
  %v1310 = vrcp.pop %v1309
  %v1311 = vmul.f32 %v1309, %v1310
  %v1312 = vsub.f32 1.0, %v1311
  %v1313 = vmul.f32 %v1310, %v1312
  %v1314 = vadd.f32 %v1310, %v1313
  %vm1315 = vweird.f32 %v1309
  %vm1316 = vweird.f32 %v1310
  %vm1317 = vmor %vm1315, %vm1316
  %v1318 = vsel %vm1317, %v1310, %v1314
  %v1319 = vand.u32 2147483647, %v1309
  %vm1320 = vcmp.eq.f32.partialorder %v1319, 8.507059e+37
  %v1321 = vand.u32 %v1309, 2147483648
  %v1322 = vor.u32 1.1754944e-38, %v1321
  %v1323 = vsel %vm1320, %v1322, %v1318
  %v1324 = vmul.f32 1.0, %v1323
  %v1327 = vrot.slane %v1303, 7
  %v1328 = vsel %vm1044, %v1283, %v1327
  %1329 = vrot.lane.b32.xlu0 %v1328, 32
  %v1330 = vpop.permute.xlu0 %1329
  %v1331 = vrot.slane %v1330, 1
  %v1332 = vsel %vm105, %v1330, %v1331
  %v1334 = vmul.f32 %v1324, %v1332
  %1336 = vrot.lane.b32.xlu0 %v1334, 96
  %v1337 = vpop.permute.xlu0 %1336
  %v1338 = vrot.slane %v1337, 7
  %v1339 = vsel %vm1056, %v1338, %v1337
  %v1341 = vadd.f32 %v818, %v1339
  %v1342 = vtanh.pop %v1341
  %v1343 = vsub.f32 1.0, %v1324
  %1345 = vrot.lane.b32.xlu0 %v1342, 80
  %v1346 = vpop.permute.xlu0 %1345
  %v1347 = vrot.slane %v1346, 1
  %v1348 = vsel %vm970, %v1346, %v1347
  %v1350 = vmul.f32 %v1343, %v1348
  %v1351 = vmul.f32 %v1324, %v1258
  %v1352 = vadd.f32 %v1350, %v1351
  %v1354 = vperm.slane %v1352, 0
  %1355 = vrot.lane.b32.xlu0 %v1354, 80
  %v1356 = vpop.permute.xlu0 %1355
  %v1357 = vsel %vm835, %v1356, 0
  %1359 = vmatpush.msra.mxu0 0.0
  %1360 = vmatpush.msra.mxu0 0.0
  %1361 = vmatpush.msra.mxu0 0.0
  %1362 = vmatpush.msra.mxu0 0.0
  %1363 = vmatpush.msra.mxu0 0.0
  %1364 = vmatpush.msra.mxu0 0.0
  %1365 = vmatpush.msra.mxu0 0.0
  %1366 = vmatpush.msra.mxu0 0.0
  %1367 = vmatpush.msra.mxu0 0.0
  %1368 = vmatpush.msra.mxu0 0.0
  %1369 = vmatpush.msra.mxu0 %v815
  %1370 = vmatpush.msra.mxu0 %v813
  %1371 = vmatpush.msra.mxu0 %v811
  %1372 = vmatpush.msra.mxu0 %v809
  %1373 = vmatpush.msra.mxu0 %v807
  %1374 = vmatpush.msra.mxu0 %v805
  %1375 = vmatmul.f32.gmra.mxu0 %v1357
  %v1376 = vpop.f32.mrf.mxu0
  %v1377 = vadd.f32 %v880, %v1376
  %1378 = vdwg.mxu0
  %1379 = vmatpush.msra.mxu0 0.0
  %1380 = vmatpush.msra.mxu0 0.0
  %1381 = vmatpush.msra.mxu0 0.0
  %1382 = vmatpush.msra.mxu0 0.0
  %1383 = vmatpush.msra.mxu0 0.0
  %1384 = vmatpush.msra.mxu0 0.0
  %1385 = vmatpush.msra.mxu0 0.0
  %1386 = vmatpush.msra.mxu0 0.0
  %1387 = vmatpush.msra.mxu0 0.0
  %1388 = vmatpush.msra.mxu0 0.0
  %1389 = vmatpush.msra.mxu0 %v816
  %1390 = vmatpush.msra.mxu0 %v814
  %1391 = vmatpush.msra.mxu0 %v812
  %1392 = vmatpush.msra.mxu0 %v810
  %1393 = vmatpush.msra.mxu0 %v808
  %1394 = vmatpush.msra.mxu0 %v806
  %1395 = vmatmul.f32.gmra.mxu0 %v1357
  %v1396 = vpop.f32.mrf.mxu0
  %v1397 = vadd.f32 %v881, %v1396
  %1398 = vdwg.mxu0
  %v1399 = vadd.f32 %v818, %v1377
  %v1400 = vxor.u32 %v1399, 2147483648
  %v1401 = vmul.f32 %v1400, 1.442695
  %v1402 = vpow.pop %v1401
  %v1403 = vadd.f32 %v1402, 1.0
  %v1404 = vrcp.pop %v1403
  %v1405 = vmul.f32 %v1403, %v1404
  %v1406 = vsub.f32 1.0, %v1405
  %v1407 = vmul.f32 %v1404, %v1406
  %v1408 = vadd.f32 %v1404, %v1407
  %vm1409 = vweird.f32 %v1403
  %vm1410 = vweird.f32 %v1404
  %vm1411 = vmor %vm1409, %vm1410
  %v1412 = vsel %vm1411, %v1404, %v1408
  %v1413 = vand.u32 2147483647, %v1403
  %vm1414 = vcmp.eq.f32.partialorder %v1413, 8.507059e+37
  %v1415 = vand.u32 %v1403, 2147483648
  %v1416 = vor.u32 1.1754944e-38, %v1415
  %v1417 = vsel %vm1414, %v1416, %v1412
  %v1418 = vmul.f32 1.0, %v1417
  %v1421 = vrot.slane %v1397, 7
  %v1422 = vsel %vm1044, %v1377, %v1421
  %1423 = vrot.lane.b32.xlu0 %v1422, 32
  %v1424 = vpop.permute.xlu0 %1423
  %v1425 = vrot.slane %v1424, 1
  %v1426 = vsel %vm105, %v1424, %v1425
  %v1428 = vmul.f32 %v1418, %v1426
  %1430 = vrot.lane.b32.xlu0 %v1428, 96
  %v1431 = vpop.permute.xlu0 %1430
  %v1432 = vrot.slane %v1431, 7
  %v1433 = vsel %vm1056, %v1432, %v1431
  %v1435 = vadd.f32 %v818, %v1433
  %v1436 = vtanh.pop %v1435
  %v1437 = vsub.f32 1.0, %v1418
  %1439 = vrot.lane.b32.xlu0 %v1436, 80
  %v1440 = vpop.permute.xlu0 %1439
  %v1441 = vrot.slane %v1440, 1
  %v1442 = vsel %vm970, %v1440, %v1441
  %v1444 = vmul.f32 %v1437, %v1442
  %v1445 = vmul.f32 %v1418, %v1352
  %v1446 = vadd.f32 %v1444, %v1445
  %v1448 = vperm.slane %v1446, 0
  %1449 = vrot.lane.b32.xlu0 %v1448, 80
  %v1450 = vpop.permute.xlu0 %1449
  %v1451 = vsel %vm835, %v1450, 0
  %1453 = vmatpush.msra.mxu0 0.0
  %1454 = vmatpush.msra.mxu0 0.0
  %1455 = vmatpush.msra.mxu0 0.0
  %1456 = vmatpush.msra.mxu0 0.0
  %1457 = vmatpush.msra.mxu0 0.0
  %1458 = vmatpush.msra.mxu0 0.0
  %1459 = vmatpush.msra.mxu0 0.0
  %1460 = vmatpush.msra.mxu0 0.0
  %1461 = vmatpush.msra.mxu0 0.0
  %1462 = vmatpush.msra.mxu0 0.0
  %1463 = vmatpush.msra.mxu0 %v815
  %1464 = vmatpush.msra.mxu0 %v813
  %1465 = vmatpush.msra.mxu0 %v811
  %1466 = vmatpush.msra.mxu0 %v809
  %1467 = vmatpush.msra.mxu0 %v807
  %1468 = vmatpush.msra.mxu0 %v805
  %1469 = vmatmul.f32.gmra.mxu0 %v1451
  %v1470 = vpop.f32.mrf.mxu0
  %v1471 = vadd.f32 %v880, %v1470
  %1472 = vdwg.mxu0
  %1473 = vmatpush.msra.mxu0 0.0
  %1474 = vmatpush.msra.mxu0 0.0
  %1475 = vmatpush.msra.mxu0 0.0
  %1476 = vmatpush.msra.mxu0 0.0
  %1477 = vmatpush.msra.mxu0 0.0
  %1478 = vmatpush.msra.mxu0 0.0
  %1479 = vmatpush.msra.mxu0 0.0
  %1480 = vmatpush.msra.mxu0 0.0
  %1481 = vmatpush.msra.mxu0 0.0
  %1482 = vmatpush.msra.mxu0 0.0
  %1483 = vmatpush.msra.mxu0 %v816
  %1484 = vmatpush.msra.mxu0 %v814
  %1485 = vmatpush.msra.mxu0 %v812
  %1486 = vmatpush.msra.mxu0 %v810
  %1487 = vmatpush.msra.mxu0 %v808
  %1488 = vmatpush.msra.mxu0 %v806
  %1489 = vmatmul.f32.gmra.mxu0 %v1451
  %v1490 = vpop.f32.mrf.mxu0
  %v1491 = vadd.f32 %v881, %v1490
  %1492 = vdwg.mxu0
  %v1493 = vadd.f32 %v818, %v1471
  %v1494 = vxor.u32 %v1493, 2147483648
  %v1495 = vmul.f32 %v1494, 1.442695
  %v1496 = vpow.pop %v1495
  %v1497 = vadd.f32 %v1496, 1.0
  %v1498 = vrcp.pop %v1497
  %v1499 = vmul.f32 %v1497, %v1498
  %v1500 = vsub.f32 1.0, %v1499
  %v1501 = vmul.f32 %v1498, %v1500
  %v1502 = vadd.f32 %v1498, %v1501
  %vm1503 = vweird.f32 %v1497
  %vm1504 = vweird.f32 %v1498
  %vm1505 = vmor %vm1503, %vm1504
  %v1506 = vsel %vm1505, %v1498, %v1502
  %v1507 = vand.u32 2147483647, %v1497
  %vm1508 = vcmp.eq.f32.partialorder %v1507, 8.507059e+37
  %v1509 = vand.u32 %v1497, 2147483648
  %v1510 = vor.u32 1.1754944e-38, %v1509
  %v1511 = vsel %vm1508, %v1510, %v1506
  %v1512 = vmul.f32 1.0, %v1511
  %v1515 = vrot.slane %v1491, 7
  %v1516 = vsel %vm1044, %v1471, %v1515
  %1517 = vrot.lane.b32.xlu0 %v1516, 32
  %v1518 = vpop.permute.xlu0 %1517
  %v1519 = vrot.slane %v1518, 1
  %v1520 = vsel %vm105, %v1518, %v1519
  %v1522 = vmul.f32 %v1512, %v1520
  %1524 = vrot.lane.b32.xlu0 %v1522, 96
  %v1525 = vpop.permute.xlu0 %1524
  %v1526 = vrot.slane %v1525, 7
  %v1527 = vsel %vm1056, %v1526, %v1525
  %v1529 = vadd.f32 %v818, %v1527
  %v1530 = vtanh.pop %v1529
  %v1531 = vsub.f32 1.0, %v1512
  %1533 = vrot.lane.b32.xlu0 %v1530, 80
  %v1534 = vpop.permute.xlu0 %1533
  %v1535 = vrot.slane %v1534, 1
  %v1536 = vsel %vm970, %v1534, %v1535
  %v1538 = vmul.f32 %v1531, %v1536
  %v1539 = vmul.f32 %v1512, %v1446
  %v1540 = vadd.f32 %v1538, %v1539
  %v1542 = vperm.slane %v1540, 0
  %1543 = vrot.lane.b32.xlu0 %v1542, 80
  %v1544 = vpop.permute.xlu0 %1543
  %v1545 = vsel %vm835, %v1544, 0
  %1547 = vmatpush.msra.mxu0 0.0
  %1548 = vmatpush.msra.mxu0 0.0
  %1549 = vmatpush.msra.mxu0 0.0
  %1550 = vmatpush.msra.mxu0 0.0
  %1551 = vmatpush.msra.mxu0 0.0
  %1552 = vmatpush.msra.mxu0 0.0
  %1553 = vmatpush.msra.mxu0 0.0
  %1554 = vmatpush.msra.mxu0 0.0
  %1555 = vmatpush.msra.mxu0 0.0
  %1556 = vmatpush.msra.mxu0 0.0
  %1557 = vmatpush.msra.mxu0 %v815
  %1558 = vmatpush.msra.mxu0 %v813
  %1559 = vmatpush.msra.mxu0 %v811
  %1560 = vmatpush.msra.mxu0 %v809
  %1561 = vmatpush.msra.mxu0 %v807
  %1562 = vmatpush.msra.mxu0 %v805
  %1563 = vmatmul.f32.gmra.mxu0 %v1545
  %v1564 = vpop.f32.mrf.mxu0
  %v1565 = vadd.f32 %v880, %v1564
  %1566 = vdwg.mxu0
  %1567 = vmatpush.msra.mxu0 0.0
  %1568 = vmatpush.msra.mxu0 0.0
  %1569 = vmatpush.msra.mxu0 0.0
  %1570 = vmatpush.msra.mxu0 0.0
  %1571 = vmatpush.msra.mxu0 0.0
  %1572 = vmatpush.msra.mxu0 0.0
  %1573 = vmatpush.msra.mxu0 0.0
  %1574 = vmatpush.msra.mxu0 0.0
  %1575 = vmatpush.msra.mxu0 0.0
  %1576 = vmatpush.msra.mxu0 0.0
  %1577 = vmatpush.msra.mxu0 %v816
  %1578 = vmatpush.msra.mxu0 %v814
  %1579 = vmatpush.msra.mxu0 %v812
  %1580 = vmatpush.msra.mxu0 %v810
  %1581 = vmatpush.msra.mxu0 %v808
  %1582 = vmatpush.msra.mxu0 %v806
  %1583 = vmatmul.f32.gmra.mxu0 %v1545
  %v1584 = vpop.f32.mrf.mxu0
  %v1585 = vadd.f32 %v881, %v1584
  %1586 = vdwg.mxu0
  %v1587 = vadd.f32 %v818, %v1565
  %v1588 = vxor.u32 %v1587, 2147483648
  %v1589 = vmul.f32 %v1588, 1.442695
  %v1590 = vpow.pop %v1589
  %v1591 = vadd.f32 %v1590, 1.0
  %v1592 = vrcp.pop %v1591
  %v1593 = vmul.f32 %v1591, %v1592
  %v1594 = vsub.f32 1.0, %v1593
  %v1595 = vmul.f32 %v1592, %v1594
  %v1596 = vadd.f32 %v1592, %v1595
  %vm1597 = vweird.f32 %v1591
  %vm1598 = vweird.f32 %v1592
  %vm1599 = vmor %vm1597, %vm1598
  %v1600 = vsel %vm1599, %v1592, %v1596
  %v1601 = vand.u32 2147483647, %v1591
  %vm1602 = vcmp.eq.f32.partialorder %v1601, 8.507059e+37
  %v1603 = vand.u32 %v1591, 2147483648
  %v1604 = vor.u32 1.1754944e-38, %v1603
  %v1605 = vsel %vm1602, %v1604, %v1600
  %v1606 = vmul.f32 1.0, %v1605
  %v1609 = vrot.slane %v1585, 7
  %v1610 = vsel %vm1044, %v1565, %v1609
  %1611 = vrot.lane.b32.xlu0 %v1610, 32
  %v1612 = vpop.permute.xlu0 %1611
  %v1613 = vrot.slane %v1612, 1
  %v1614 = vsel %vm105, %v1612, %v1613
  %v1616 = vmul.f32 %v1606, %v1614
  %1618 = vrot.lane.b32.xlu0 %v1616, 96
  %v1619 = vpop.permute.xlu0 %1618
  %v1620 = vrot.slane %v1619, 7
  %v1621 = vsel %vm1056, %v1620, %v1619
  %v1623 = vadd.f32 %v818, %v1621
  %v1624 = vtanh.pop %v1623
  %v1625 = vsub.f32 1.0, %v1606
  %1627 = vrot.lane.b32.xlu0 %v1624, 80
  %v1628 = vpop.permute.xlu0 %1627
  %v1629 = vrot.slane %v1628, 1
  %v1630 = vsel %vm970, %v1628, %v1629
  %v1632 = vmul.f32 %v1625, %v1630
  %v1633 = vmul.f32 %v1606, %v1540
  %v1634 = vadd.f32 %v1632, %v1633
  %v1642 = vperm.slane %v1634, 0
  %v1644 = vsel %vm1044, %v975, %v1072
  %vm1645 = vcmask 1041408
  %v1646 = vsel %vm1645, %v1644, %v1166
  %vm1647 = vcmask 1042432
  %v1648 = vsel %vm1647, %v1646, %v1260
  %v1649 = vsel %vm47, %v1648, %v1354
  %vm1650 = vcmask 1044480
  %v1651 = vsel %vm1650, %v1649, %v1448
  %vm1652 = vcmask 1045504
  %v1653 = vsel %vm1652, %v1651, %v1542
  %vm1654 = vcmask 1046528
  %v1655 = vsel %vm1654, %v1653, %v1642
  %v1656 = vld [vmem:[%s0 + $0x210] sm:$0xff]
  %v1657 = vld [vmem:[%s0 + $0x220] sm:$0xff]
  %v1658 = vld [vmem:[%s0 + $0x230] sm:$0xff]
  %v1659 = vld [vmem:[%s0 + $0x240] sm:$0xff]
  %v1660 = vld [vmem:[%s0 + $0x250] sm:$0xff]
  %v1661 = vld [vmem:[%s0 + $0x260] sm:$0xff]
  %v1662 = vld [vmem:[%s0 + $0x270] ss:$0 sm:$0xff]
  %1664 = vrot.lane.b32.xlu0 %v1655, 80
  %v1665 = vpop.permute.xlu0 %1664
  %v1666 = vsel %vm835, %v1665, 0
  %1668 = vmatpush.msra.mxu0 0.0
  %1669 = vmatpush.msra.mxu0 0.0
  %1670 = vmatpush.msra.mxu0 0.0
  %1671 = vmatpush.msra.mxu0 0.0
  %1672 = vmatpush.msra.mxu0 0.0
  %1673 = vmatpush.msra.mxu0 0.0
  %1674 = vmatpush.msra.mxu0 0.0
  %1675 = vmatpush.msra.mxu0 0.0
  %1676 = vmatpush.msra.mxu0 0.0
  %1677 = vmatpush.msra.mxu0 0.0
  %1678 = vmatpush.msra.mxu0 %v1661
  %1679 = vmatpush.msra.mxu0 %v1660
  %1680 = vmatpush.msra.mxu0 %v1659
  %1681 = vmatpush.msra.mxu0 %v1658
  %1682 = vmatpush.msra.mxu0 %v1657
  %1683 = vmatpush.msra.mxu0 %v1656
  %1684 = vmatmul.f32.gmra.mxu0 %v1666
  %v1685 = vpop.f32.mrf.mxu0
  %v1686 = vadd.f32 %v1662, %v1685
  %1687 = vdwg.mxu0
  %v1688 = vld [vmem:[%s0 + $0x280] sm:$0xff]
  %vm1689 = vcmask 64512
  %v1691 = vsel %vm1689, %v1688, 0
  %1693 = vmatpush.msra.mxu0 0.0
  %1694 = vmatpush.msra.mxu0 0.0
  %1695 = vmatpush.msra.mxu0 0.0
  %1696 = vmatpush.msra.mxu0 0.0
  %1697 = vmatpush.msra.mxu0 0.0
  %1698 = vmatpush.msra.mxu0 0.0
  %1699 = vmatpush.msra.mxu0 0.0
  %1700 = vmatpush.msra.mxu0 0.0
  %1701 = vmatpush.msra.mxu0 0.0
  %1702 = vmatpush.msra.mxu0 0.0
  %1703 = vmatpush.msra.mxu0 0.0
  %1704 = vmatpush.msra.mxu0 0.0
  %1705 = vmatpush.msra.mxu0 0.0
  %1706 = vmatpush.msra.mxu0 0.0
  %1707 = vmatpush.msra.mxu0 0.0
  %1708 = vmatpush.msra.mxu0 %v1686
  %1709 = vmatmul.f32.gmra.mxu0 %v1691
  %v1710 = vpop.f32.mrf.mxu0
  %v1711 = vadd.f32 0.0, %v1710
  %1712 = vdwg.mxu0
  %v1713 = vld [vmem:[%s1 + $0x48] sm:$0x1]
  %v1714 = vperm.slane %v1713, 0
  %v1715 = vadd.f32 %v1714, %v1711
  %vm1716 = vcmask 15360
  %1717 = vst.msk [vmem:[%s2] sm:$0xff] %vm1716, %v1715
  // Predicated region
  $region10: #{model_forward.1} parent=0 // pred_check
    _
  $region11: #{model_forward.1} parent=0 // pred_check_branch
    %1719 = sbr.rel (0) target = $region13
  $region12: #{model_forward.1} parent=0 // pred_region
    _
  $region13: #{model_forward.1} parent=0 // pred_fallthru
    _
  // Predicated region
  $region14: #{model_forward.1} parent=0 // pred_check
    _
  $region15: #{model_forward.1} parent=0 // pred_check_branch
    %1721 = sbr.rel (0) target = $region17
  $region16: #{model_forward.1} parent=0 // pred_region
    _
  $region17: #{model_forward.1} parent=0 // pred_fallthru
    _

</llo_original>
